<compile_context>
chip_gen: v7x
topology: tpu7x:2x2x1
jax: 0.10.0
libtpu: 0.0.40
codegen_flags: <defaults>
</compile_context>

<pallas_src>
import functools
import math

import jax
import jax.numpy as jnp
from jax.experimental import pallas as pl
from jax.experimental.pallas import tpu as pltpu

HID = 100     # ChenNet's fixed classifier hidden width
LANE = 128    # TPU lane width; all matmul dims padded to multiples of this


def _round_up(a, b):
    return (a + b - 1) // b * b


# ----------------------------------------------------------------------------
# Wrapper-side tap builder: C_in*9 shifted "valid" slabs of a channel-major
# activation.  Pure XLA ops (fused under jit); keeps relayout out of kernels.
# ----------------------------------------------------------------------------
def _build_taps(xc, flatten_hw=True):
    # xc: (C_in, N, H, W) channel-major -> (C_in*9, N, Ho*Wo) or (C_in*9, N, Ho, Wo)
    c_in, n, h, w = xc.shape
    ho, wo = h - 2, w - 2
    slabs = []
    for ci in range(c_in):
        for ky in range(3):
            for kx in range(3):
                s = xc[ci, :, ky:ky + ho, kx:kx + wo]
                slabs.append(s.reshape(n, ho * wo) if flatten_hw else s)
    return jnp.stack(slabs, axis=0)


# ----------------------------------------------------------------------------
# Kernel 1 (only used when layers > 1): 3x3 valid conv + ReLU on tap slabs.
# Channel-major output: each channel is one contiguous (N_blk, P) store.
# ----------------------------------------------------------------------------
def _conv3x3_relu_kernel(wc_ref, bc_ref, taps_ref, o_ref):
    # wc_ref: (C_out*C_in*9,) SMEM   bc_ref: (C_out,) SMEM
    # taps_ref: (C_in*9, N_blk, P) VMEM   o_ref: (C_out, N_blk, P) VMEM
    k9 = taps_ref.shape[0]
    c_out = o_ref.shape[0]
    for co in range(c_out):
        acc = wc_ref[co * k9] * taps_ref[0]
        for k in range(1, k9):
            acc = acc + wc_ref[co * k9 + k] * taps_ref[k]
        o_ref[co] = jnp.maximum(acc + bc_ref[co], 0.0)


def conv3x3_relu(taps, wc, bc, n_blk):
    """taps: (C_in*9, N_pad, P) f32; wc: (C_out, C_in, 3, 3); bc: (C_out,).
    Returns channel-major activations (C_out, N_pad, P)."""
    k9, n_pad, p = taps.shape
    c_out = wc.shape[0]
    grid = (n_pad // n_blk,)
    return pl.pallas_call(
        _conv3x3_relu_kernel,
        out_shape=jax.ShapeDtypeStruct((c_out, n_pad, p), jnp.float32),
        grid=grid,
        in_specs=[
            pl.BlockSpec(memory_space=pltpu.MemorySpace.SMEM),     # conv weights
            pl.BlockSpec(memory_space=pltpu.MemorySpace.SMEM),     # conv bias
            pl.BlockSpec((k9, n_blk, p), lambda i: (0, i, 0)),     # taps (batch-tiled)
        ],
        out_specs=pl.BlockSpec((c_out, n_blk, p), lambda i: (0, i, 0)),
        compiler_params=pltpu.CompilerParams(
            dimension_semantics=("parallel",)),
    )(wc.reshape(-1), bc, taps)


# ----------------------------------------------------------------------------
# Kernel 2: fused [last conv + ReLU] -> flatten(NCHW) -> Linear -> ReLU
#           -> (Dropout: identity) -> Linear -> LogSoftmax (masked to the
#           real classes; class dim padded to 128 for a lane-dense store).
# ----------------------------------------------------------------------------
def _fused_lastconv_classifier_kernel(n_classes, wc_ref, bc_ref, taps_ref,
                                      w1_ref, b1_ref, w2_ref, b2_ref, o_ref):
    # wc_ref : (C_out*C_in*9,) SMEM    bc_ref: (C_out,) SMEM
    # taps_ref: (C_in*9, N_blk, P_pad) VMEM
    # w1_ref : (C_out, P_pad, HID_PAD) VMEM (Linear1 split per conv channel)
    # b1_ref : (1, HID_PAD) VMEM       w2_ref: (HID_PAD, C_PAD) VMEM
    # b2_ref : (1, C_PAD) VMEM         o_ref : (N_blk, C_PAD) VMEM
    k9 = taps_ref.shape[0]
    c_out = w1_ref.shape[0]

    acc1 = None
    for co in range(c_out):
        # 3x3 conv for output channel `co`: C_in*9 scalar FMAs on the VPU over
        # lane-dense (N_blk, P_pad) slabs (tap slices prebuilt in the wrapper).
        pre = wc_ref[co * k9] * taps_ref[0]
        for k in range(1, k9):
            pre = pre + wc_ref[co * k9 + k] * taps_ref[k]
        z = jnp.maximum(pre + bc_ref[co], 0.0)             # (N_blk, P_pad), ReLU
        # Flattened-NCHW contraction against the matching Linear1 block (MXU).
        part = jnp.dot(z, w1_ref[co], preferred_element_type=jnp.float32)
        acc1 = part if acc1 is None else acc1 + part

    h = jnp.maximum(acc1 + b1_ref[...], 0.0)               # (N_blk, HID_PAD)
    # Dropout(0.7) is the identity at inference time.
    logits = jnp.dot(h, w2_ref[...],
                     preferred_element_type=jnp.float32) + b2_ref[...]
    # LogSoftmax over the real classes only (padded class columns masked out).
    col = jax.lax.broadcasted_iota(jnp.int32, logits.shape, 1)
    lm = jnp.where(col < n_classes, logits, -jnp.inf)
    m = jnp.max(lm, axis=1, keepdims=True)
    lse = jnp.log(jnp.sum(jnp.exp(lm - m), axis=1, keepdims=True)) + m
    o_ref[...] = logits - lse                              # lane-dense store


def fused_lastconv_classifier(taps, wc_flat, bc, w1_r, b1_p, w2_p, b2_p,
                              n_blk, n_classes):
    k9, n_pad, p_pad = taps.shape
    c_out, _, hpad = w1_r.shape
    c_pad = w2_p.shape[1]
    grid = (n_pad // n_blk,)
    kern = functools.partial(_fused_lastconv_classifier_kernel, n_classes)
    return pl.pallas_call(
        kern,
        out_shape=jax.ShapeDtypeStruct((n_pad, c_pad), jnp.float32),
        grid=grid,
        in_specs=[
            pl.BlockSpec(memory_space=pltpu.MemorySpace.SMEM),       # conv w (scalars)
            pl.BlockSpec(memory_space=pltpu.MemorySpace.SMEM),       # conv b
            pl.BlockSpec((k9, n_blk, p_pad), lambda i: (0, i, 0)),   # taps (batch-tiled)
            pl.BlockSpec((c_out, p_pad, hpad), lambda i: (0, 0, 0)), # w1 blocks (resident)
            pl.BlockSpec((1, hpad), lambda i: (0, 0)),               # b1
            pl.BlockSpec((hpad, c_pad), lambda i: (0, 0)),           # w2
            pl.BlockSpec((1, c_pad), lambda i: (0, 0)),              # b2
        ],
        out_specs=pl.BlockSpec((n_blk, c_pad), lambda i: (i, 0)),
        compiler_params=pltpu.CompilerParams(
            dimension_semantics=("parallel",)),                      # v7x: 2 TCs
    )(wc_flat, bc, taps, w1_r, b1_p, w2_p, b2_p)


# ----------------------------------------------------------------------------
# Parameter construction (deterministic, mirrors ChenNet.__init__ / init_weights)
# ----------------------------------------------------------------------------
def _xavier_uniform(key, shape, fan_in, fan_out):
    bound = math.sqrt(6.0 / (fan_in + fan_out))
    return jax.random.uniform(key, shape, jnp.float32, -bound, bound)


def make_chennet_params(key, n_classes=2, kernels=4, layers=1, in_channels=1,
                        tensor_width=28):
    conv_params = []
    ic = in_channels
    oc = kernels
    for _ in range(layers):
        key, kw = jax.random.split(key)
        w = _xavier_uniform(kw, (oc, ic, 3, 3), fan_in=ic * 9, fan_out=oc * 9)
        b = jnp.full((oc,), 0.01, jnp.float32)
        conv_params.append((w, b))
        ic = oc
        oc = oc + 2
    out_dim = (oc - 2) * (tensor_width - layers * 2) ** 2

    key, k1, k2 = jax.random.split(key, 3)
    # PyTorch Linear weights are (out, in); store transposed for x @ W.T form.
    w1 = _xavier_uniform(k1, (HID, out_dim), fan_in=out_dim, fan_out=HID).T
    b1 = jnp.full((HID,), 0.01, jnp.float32)
    w2 = _xavier_uniform(k2, (n_classes, HID), fan_in=HID, fan_out=n_classes).T
    b2 = jnp.full((n_classes,), 0.01, jnp.float32)
    return conv_params, (w1, b1, w2, b2), out_dim


# ----------------------------------------------------------------------------
# Full forward pass (jit-able; wrapper plumbing fuses into the XLA program)
# ----------------------------------------------------------------------------
def chennet_forward(x, conv_params, cls_params):
    # x: (N, C_in, H, W) -- NCHW, like PyTorch.
    w1, b1, w2, b2 = cls_params
    n_classes = w2.shape[1]
    hid = w1.shape[1]
    n = x.shape[0]

    # Pad batch to a sublane-friendly block and tile it over a parallel grid.
    n_blk = min(128, _round_up(n, 8))
    n_pad = _round_up(n, n_blk)
    if n_pad != n:
        x = jnp.concatenate(
            [x, jnp.zeros((n_pad - n,) + x.shape[1:], x.dtype)], axis=0)

    # Channel-major layout (C, N, H, W): each channel is a lane-dense slab,
    # so kernels never do per-channel strided stores.
    xc = jnp.transpose(x, (1, 0, 2, 3))

    # All conv layers except the last run as standalone conv+ReLU kernels
    # (only exercised when layers > 1).
    for (w, b) in conv_params[:-1]:
        h_in, w_in = xc.shape[2], xc.shape[3]
        taps = _build_taps(xc, flatten_hw=True)             # (Cin*9, N_pad, P)
        act = conv3x3_relu(taps, w, b, n_blk)               # (Cout, N_pad, P)
        xc = act.reshape(w.shape[0], n_pad, h_in - 2, w_in - 2)

    # Last conv layer is fused with the classifier.
    w_last, b_last = conv_params[-1]
    c_last = w_last.shape[0]
    taps = _build_taps(xc, flatten_hw=True)                 # (Cin*9, N_pad, P)
    p = taps.shape[2]
    assert w1.shape[0] == c_last * p, (w1.shape, c_last, p)

    # Zero-pad P, hidden and class dims to full 128-lane MXU tiles (exact:
    # padded taps columns hit zero w1 rows; padded hidden/class weights are
    # zero; log-softmax masks padded classes inside the kernel).
    p_pad = _round_up(p, LANE)
    hid_pad = _round_up(hid, LANE)
    c_pad = _round_up(n_classes, LANE)
    taps = jnp.pad(taps, ((0, 0), (0, 0), (0, p_pad - p)))
    w1_r = jnp.pad(w1.reshape(c_last, p, hid),
                   ((0, 0), (0, p_pad - p), (0, hid_pad - hid)))
    b1_p = jnp.pad(b1, (0, hid_pad - hid)).reshape(1, hid_pad)
    w2_p = jnp.pad(w2, ((0, hid_pad - hid), (0, c_pad - n_classes)))
    b2_p = jnp.pad(b2, (0, c_pad - n_classes)).reshape(1, c_pad)

    out = fused_lastconv_classifier(
        taps, w_last.reshape(-1), b_last, w1_r, b1_p, w2_p, b2_p,
        n_blk, n_classes)
    return out[:n, :n_classes]


# ----------------------------------------------------------------------------
# Pure-JAX reference (no Pallas) for a correctness cross-check.
# ----------------------------------------------------------------------------
def chennet_reference(x, conv_params, cls_params):
    for (w, b) in conv_params:
        x = jax.lax.conv_general_dilated(
            x, w, (1, 1), 'VALID',
            dimension_numbers=('NCHW', 'OIHW', 'NCHW'))
        x = jnp.maximum(x + b[None, :, None, None], 0.0)
    n = x.shape[0]
    xf = x.reshape(n, -1)
    w1, b1, w2, b2 = cls_params
    h = jnp.maximum(xf @ w1 + b1, 0.0)
    logits = h @ w2 + b2
    return jax.nn.log_softmax(logits, axis=1)


if __name__ == "__main__":
    def run_case(n_classes, kernels, layers, in_channels, tensor_width, batch):
        key = jax.random.PRNGKey(0)
        key, kx, kp = jax.random.split(key, 3)
        x = jax.random.normal(
            kx, (batch, in_channels, tensor_width, tensor_width), jnp.float32)
        conv_params, cls_params, _ = make_chennet_params(
            kp, n_classes=n_classes, kernels=kernels, layers=layers,
            in_channels=in_channels, tensor_width=tensor_width)
        fwd = jax.jit(chennet_forward)
        out = jax.block_until_ready(fwd(x, conv_params, cls_params))
        assert out.shape == (batch, n_classes), out.shape
        # LogSoftmax rows must exponentiate-sum to ~1.
        assert bool(jnp.all(jnp.abs(jnp.sum(jnp.exp(out), axis=1) - 1.0) < 1e-5))
        ref = chennet_reference(x, conv_params, cls_params)
        max_err = float(jnp.max(jnp.abs(out - ref)))
        assert max_err < 2e-4, max_err

    # ChenNet default depth (layers=1): single fused kernel for the whole net.
    run_case(n_classes=2, kernels=4, layers=1, in_channels=1,
             tensor_width=16, batch=2)
    # layers=2 exercises the standalone conv+ReLU kernel and batch padding.
    run_case(n_classes=3, kernels=4, layers=2, in_channels=1,
             tensor_width=12, batch=5)

    print("KERNEL_OK")
</pallas_src>

<mosaic_0001>
module attributes {stable_mosaic.version = 11 : i64} {
  func.func @_fused_lastconv_classifier_kernel(%arg0: i32, %arg1: memref<36xf32, #tpu.memory_space<smem>>, %arg2: memref<4xf32, #tpu.memory_space<smem>>, %arg3: memref<9x8x256xf32, #tpu.memory_space<vmem>>, %arg4: memref<4x256x128xf32, #tpu.memory_space<vmem>>, %arg5: memref<1x128xf32, #tpu.memory_space<vmem>>, %arg6: memref<128x128xf32, #tpu.memory_space<vmem>>, %arg7: memref<1x128xf32, #tpu.memory_space<vmem>>, %arg8: memref<8x128xf32, #tpu.memory_space<vmem>>) attributes {dimension_semantics = [#tpu.dimension_semantics<parallel>], iteration_bounds = array<i64: 1>, scalar_prefetch = 0 : i64, scratch_operands = 0 : i64, tpu.core_type = #tpu.core_type<tc>, window_params = [{transform_indices = @transform_0, window_bounds = array<i64: 36>}, {transform_indices = @transform_1, window_bounds = array<i64: 4>}, {transform_indices = @transform_2, window_bounds = array<i64: 9, 8, 256>}, {pipeline_mode = #tpu.pipeline_mode<synchronous>, transform_indices = @transform_3, window_bounds = array<i64: 4, 256, 128>}, {pipeline_mode = #tpu.pipeline_mode<synchronous>, transform_indices = @transform_4, window_bounds = array<i64: 1, 128>}, {pipeline_mode = #tpu.pipeline_mode<synchronous>, transform_indices = @transform_5, window_bounds = array<i64: 128, 128>}, {pipeline_mode = #tpu.pipeline_mode<synchronous>, transform_indices = @transform_6, window_bounds = array<i64: 1, 128>}, {transform_indices = @transform_7, window_bounds = array<i64: 8, 128>}]} {
    %c0 = arith.constant 0 : index
    %0 = memref.load %arg1[%c0] : memref<36xf32, #tpu.memory_space<smem>>
    %c0_0 = arith.constant 0 : index
    %c0_1 = arith.constant 0 : index
    %c0_2 = arith.constant 0 : index
    %1 = vector.load %arg3[%c0_0, %c0_1, %c0_2] : memref<9x8x256xf32, #tpu.memory_space<vmem>>, vector<1x8x256xf32>
    %2 = vector.shape_cast %1 : vector<1x8x256xf32> to vector<8x256xf32>
    %3 = vector.broadcast %0 : f32 to vector<8x256xf32>
    %4 = arith.mulf %3, %2 : vector<8x256xf32>
    %c1 = arith.constant 1 : index
    %5 = memref.load %arg1[%c1] : memref<36xf32, #tpu.memory_space<smem>>
    %c1_3 = arith.constant 1 : index
    %c0_4 = arith.constant 0 : index
    %c0_5 = arith.constant 0 : index
    %6 = vector.load %arg3[%c1_3, %c0_4, %c0_5] : memref<9x8x256xf32, #tpu.memory_space<vmem>>, vector<1x8x256xf32>
    %7 = vector.shape_cast %6 : vector<1x8x256xf32> to vector<8x256xf32>
    %8 = vector.broadcast %5 : f32 to vector<8x256xf32>
    %9 = arith.mulf %8, %7 : vector<8x256xf32>
    %10 = arith.addf %4, %9 : vector<8x256xf32>
    %c2 = arith.constant 2 : index
    %11 = memref.load %arg1[%c2] : memref<36xf32, #tpu.memory_space<smem>>
    %c2_6 = arith.constant 2 : index
    %c0_7 = arith.constant 0 : index
    %c0_8 = arith.constant 0 : index
    %12 = vector.load %arg3[%c2_6, %c0_7, %c0_8] : memref<9x8x256xf32, #tpu.memory_space<vmem>>, vector<1x8x256xf32>
    %13 = vector.shape_cast %12 : vector<1x8x256xf32> to vector<8x256xf32>
    %14 = vector.broadcast %11 : f32 to vector<8x256xf32>
    %15 = arith.mulf %14, %13 : vector<8x256xf32>
    %16 = arith.addf %10, %15 : vector<8x256xf32>
    %c3 = arith.constant 3 : index
    %17 = memref.load %arg1[%c3] : memref<36xf32, #tpu.memory_space<smem>>
    %c3_9 = arith.constant 3 : index
    %c0_10 = arith.constant 0 : index
    %c0_11 = arith.constant 0 : index
    %18 = vector.load %arg3[%c3_9, %c0_10, %c0_11] : memref<9x8x256xf32, #tpu.memory_space<vmem>>, vector<1x8x256xf32>
    %19 = vector.shape_cast %18 : vector<1x8x256xf32> to vector<8x256xf32>
    %20 = vector.broadcast %17 : f32 to vector<8x256xf32>
    %21 = arith.mulf %20, %19 : vector<8x256xf32>
    %22 = arith.addf %16, %21 : vector<8x256xf32>
    %c4 = arith.constant 4 : index
    %23 = memref.load %arg1[%c4] : memref<36xf32, #tpu.memory_space<smem>>
    %c4_12 = arith.constant 4 : index
    %c0_13 = arith.constant 0 : index
    %c0_14 = arith.constant 0 : index
    %24 = vector.load %arg3[%c4_12, %c0_13, %c0_14] : memref<9x8x256xf32, #tpu.memory_space<vmem>>, vector<1x8x256xf32>
    %25 = vector.shape_cast %24 : vector<1x8x256xf32> to vector<8x256xf32>
    %26 = vector.broadcast %23 : f32 to vector<8x256xf32>
    %27 = arith.mulf %26, %25 : vector<8x256xf32>
    %28 = arith.addf %22, %27 : vector<8x256xf32>
    %c5 = arith.constant 5 : index
    %29 = memref.load %arg1[%c5] : memref<36xf32, #tpu.memory_space<smem>>
    %c5_15 = arith.constant 5 : index
    %c0_16 = arith.constant 0 : index
    %c0_17 = arith.constant 0 : index
    %30 = vector.load %arg3[%c5_15, %c0_16, %c0_17] : memref<9x8x256xf32, #tpu.memory_space<vmem>>, vector<1x8x256xf32>
    %31 = vector.shape_cast %30 : vector<1x8x256xf32> to vector<8x256xf32>
    %32 = vector.broadcast %29 : f32 to vector<8x256xf32>
    %33 = arith.mulf %32, %31 : vector<8x256xf32>
    %34 = arith.addf %28, %33 : vector<8x256xf32>
    %c6 = arith.constant 6 : index
    %35 = memref.load %arg1[%c6] : memref<36xf32, #tpu.memory_space<smem>>
    %c6_18 = arith.constant 6 : index
    %c0_19 = arith.constant 0 : index
    %c0_20 = arith.constant 0 : index
    %36 = vector.load %arg3[%c6_18, %c0_19, %c0_20] : memref<9x8x256xf32, #tpu.memory_space<vmem>>, vector<1x8x256xf32>
    %37 = vector.shape_cast %36 : vector<1x8x256xf32> to vector<8x256xf32>
    %38 = vector.broadcast %35 : f32 to vector<8x256xf32>
    %39 = arith.mulf %38, %37 : vector<8x256xf32>
    %40 = arith.addf %34, %39 : vector<8x256xf32>
    %c7 = arith.constant 7 : index
    %41 = memref.load %arg1[%c7] : memref<36xf32, #tpu.memory_space<smem>>
    %c7_21 = arith.constant 7 : index
    %c0_22 = arith.constant 0 : index
    %c0_23 = arith.constant 0 : index
    %42 = vector.load %arg3[%c7_21, %c0_22, %c0_23] : memref<9x8x256xf32, #tpu.memory_space<vmem>>, vector<1x8x256xf32>
    %43 = vector.shape_cast %42 : vector<1x8x256xf32> to vector<8x256xf32>
    %44 = vector.broadcast %41 : f32 to vector<8x256xf32>
    %45 = arith.mulf %44, %43 : vector<8x256xf32>
    %46 = arith.addf %40, %45 : vector<8x256xf32>
    %c8 = arith.constant 8 : index
    %47 = memref.load %arg1[%c8] : memref<36xf32, #tpu.memory_space<smem>>
    %c8_24 = arith.constant 8 : index
    %c0_25 = arith.constant 0 : index
    %c0_26 = arith.constant 0 : index
    %48 = vector.load %arg3[%c8_24, %c0_25, %c0_26] : memref<9x8x256xf32, #tpu.memory_space<vmem>>, vector<1x8x256xf32>
    %49 = vector.shape_cast %48 : vector<1x8x256xf32> to vector<8x256xf32>
    %50 = vector.broadcast %47 : f32 to vector<8x256xf32>
    %51 = arith.mulf %50, %49 : vector<8x256xf32>
    %52 = arith.addf %46, %51 : vector<8x256xf32>
    %c0_27 = arith.constant 0 : index
    %53 = memref.load %arg2[%c0_27] : memref<4xf32, #tpu.memory_space<smem>>
    %54 = vector.broadcast %53 : f32 to vector<8x256xf32>
    %55 = arith.addf %52, %54 : vector<8x256xf32>
    %cst = arith.constant 0.000000e+00 : f32
    %56 = vector.broadcast %cst : f32 to vector<8x256xf32>
    %57 = arith.maximumf %55, %56 : vector<8x256xf32>
    %c0_28 = arith.constant 0 : index
    %c0_29 = arith.constant 0 : index
    %c0_30 = arith.constant 0 : index
    %58 = vector.load %arg4[%c0_28, %c0_29, %c0_30] : memref<4x256x128xf32, #tpu.memory_space<vmem>>, vector<1x256x128xf32>
    %59 = vector.shape_cast %58 : vector<1x256x128xf32> to vector<256x128xf32>
    %cst_31 = arith.constant dense<0.000000e+00> : vector<8x128xf32>
    %60 = tpu.matmul %57, %59, %cst_31 {dimension_numbers = #tpu.dot_dimension_numbers<[1], [0], [0], [1], [0, 0, 1, 1], [], []>} : vector<8x256xf32>, vector<256x128xf32>, vector<8x128xf32> -> vector<8x128xf32>
    %c9 = arith.constant 9 : index
    %61 = memref.load %arg1[%c9] : memref<36xf32, #tpu.memory_space<smem>>
    %c0_32 = arith.constant 0 : index
    %c0_33 = arith.constant 0 : index
    %c0_34 = arith.constant 0 : index
    %62 = vector.load %arg3[%c0_32, %c0_33, %c0_34] : memref<9x8x256xf32, #tpu.memory_space<vmem>>, vector<1x8x256xf32>
    %63 = vector.shape_cast %62 : vector<1x8x256xf32> to vector<8x256xf32>
    %64 = vector.broadcast %61 : f32 to vector<8x256xf32>
    %65 = arith.mulf %64, %63 : vector<8x256xf32>
    %c10 = arith.constant 10 : index
    %66 = memref.load %arg1[%c10] : memref<36xf32, #tpu.memory_space<smem>>
    %c1_35 = arith.constant 1 : index
    %c0_36 = arith.constant 0 : index
    %c0_37 = arith.constant 0 : index
    %67 = vector.load %arg3[%c1_35, %c0_36, %c0_37] : memref<9x8x256xf32, #tpu.memory_space<vmem>>, vector<1x8x256xf32>
    %68 = vector.shape_cast %67 : vector<1x8x256xf32> to vector<8x256xf32>
    %69 = vector.broadcast %66 : f32 to vector<8x256xf32>
    %70 = arith.mulf %69, %68 : vector<8x256xf32>
    %71 = arith.addf %65, %70 : vector<8x256xf32>
    %c11 = arith.constant 11 : index
    %72 = memref.load %arg1[%c11] : memref<36xf32, #tpu.memory_space<smem>>
    %c2_38 = arith.constant 2 : index
    %c0_39 = arith.constant 0 : index
    %c0_40 = arith.constant 0 : index
    %73 = vector.load %arg3[%c2_38, %c0_39, %c0_40] : memref<9x8x256xf32, #tpu.memory_space<vmem>>, vector<1x8x256xf32>
    %74 = vector.shape_cast %73 : vector<1x8x256xf32> to vector<8x256xf32>
    %75 = vector.broadcast %72 : f32 to vector<8x256xf32>
    %76 = arith.mulf %75, %74 : vector<8x256xf32>
    %77 = arith.addf %71, %76 : vector<8x256xf32>
    %c12 = arith.constant 12 : index
    %78 = memref.load %arg1[%c12] : memref<36xf32, #tpu.memory_space<smem>>
    %c3_41 = arith.constant 3 : index
    %c0_42 = arith.constant 0 : index
    %c0_43 = arith.constant 0 : index
    %79 = vector.load %arg3[%c3_41, %c0_42, %c0_43] : memref<9x8x256xf32, #tpu.memory_space<vmem>>, vector<1x8x256xf32>
    %80 = vector.shape_cast %79 : vector<1x8x256xf32> to vector<8x256xf32>
    %81 = vector.broadcast %78 : f32 to vector<8x256xf32>
    %82 = arith.mulf %81, %80 : vector<8x256xf32>
    %83 = arith.addf %77, %82 : vector<8x256xf32>
    %c13 = arith.constant 13 : index
    %84 = memref.load %arg1[%c13] : memref<36xf32, #tpu.memory_space<smem>>
    %c4_44 = arith.constant 4 : index
    %c0_45 = arith.constant 0 : index
    %c0_46 = arith.constant 0 : index
    %85 = vector.load %arg3[%c4_44, %c0_45, %c0_46] : memref<9x8x256xf32, #tpu.memory_space<vmem>>, vector<1x8x256xf32>
    %86 = vector.shape_cast %85 : vector<1x8x256xf32> to vector<8x256xf32>
    %87 = vector.broadcast %84 : f32 to vector<8x256xf32>
    %88 = arith.mulf %87, %86 : vector<8x256xf32>
    %89 = arith.addf %83, %88 : vector<8x256xf32>
    %c14 = arith.constant 14 : index
    %90 = memref.load %arg1[%c14] : memref<36xf32, #tpu.memory_space<smem>>
    %c5_47 = arith.constant 5 : index
    %c0_48 = arith.constant 0 : index
    %c0_49 = arith.constant 0 : index
    %91 = vector.load %arg3[%c5_47, %c0_48, %c0_49] : memref<9x8x256xf32, #tpu.memory_space<vmem>>, vector<1x8x256xf32>
    %92 = vector.shape_cast %91 : vector<1x8x256xf32> to vector<8x256xf32>
    %93 = vector.broadcast %90 : f32 to vector<8x256xf32>
    %94 = arith.mulf %93, %92 : vector<8x256xf32>
    %95 = arith.addf %89, %94 : vector<8x256xf32>
    %c15 = arith.constant 15 : index
    %96 = memref.load %arg1[%c15] : memref<36xf32, #tpu.memory_space<smem>>
    %c6_50 = arith.constant 6 : index
    %c0_51 = arith.constant 0 : index
    %c0_52 = arith.constant 0 : index
    %97 = vector.load %arg3[%c6_50, %c0_51, %c0_52] : memref<9x8x256xf32, #tpu.memory_space<vmem>>, vector<1x8x256xf32>
    %98 = vector.shape_cast %97 : vector<1x8x256xf32> to vector<8x256xf32>
    %99 = vector.broadcast %96 : f32 to vector<8x256xf32>
    %100 = arith.mulf %99, %98 : vector<8x256xf32>
    %101 = arith.addf %95, %100 : vector<8x256xf32>
    %c16 = arith.constant 16 : index
    %102 = memref.load %arg1[%c16] : memref<36xf32, #tpu.memory_space<smem>>
    %c7_53 = arith.constant 7 : index
    %c0_54 = arith.constant 0 : index
    %c0_55 = arith.constant 0 : index
    %103 = vector.load %arg3[%c7_53, %c0_54, %c0_55] : memref<9x8x256xf32, #tpu.memory_space<vmem>>, vector<1x8x256xf32>
    %104 = vector.shape_cast %103 : vector<1x8x256xf32> to vector<8x256xf32>
    %105 = vector.broadcast %102 : f32 to vector<8x256xf32>
    %106 = arith.mulf %105, %104 : vector<8x256xf32>
    %107 = arith.addf %101, %106 : vector<8x256xf32>
    %c17 = arith.constant 17 : index
    %108 = memref.load %arg1[%c17] : memref<36xf32, #tpu.memory_space<smem>>
    %c8_56 = arith.constant 8 : index
    %c0_57 = arith.constant 0 : index
    %c0_58 = arith.constant 0 : index
    %109 = vector.load %arg3[%c8_56, %c0_57, %c0_58] : memref<9x8x256xf32, #tpu.memory_space<vmem>>, vector<1x8x256xf32>
    %110 = vector.shape_cast %109 : vector<1x8x256xf32> to vector<8x256xf32>
    %111 = vector.broadcast %108 : f32 to vector<8x256xf32>
    %112 = arith.mulf %111, %110 : vector<8x256xf32>
    %113 = arith.addf %107, %112 : vector<8x256xf32>
    %c1_59 = arith.constant 1 : index
    %114 = memref.load %arg2[%c1_59] : memref<4xf32, #tpu.memory_space<smem>>
    %115 = vector.broadcast %114 : f32 to vector<8x256xf32>
    %116 = arith.addf %113, %115 : vector<8x256xf32>
    %cst_60 = arith.constant 0.000000e+00 : f32
    %117 = vector.broadcast %cst_60 : f32 to vector<8x256xf32>
    %118 = arith.maximumf %116, %117 : vector<8x256xf32>
    %c1_61 = arith.constant 1 : index
    %c0_62 = arith.constant 0 : index
    %c0_63 = arith.constant 0 : index
    %119 = vector.load %arg4[%c1_61, %c0_62, %c0_63] : memref<4x256x128xf32, #tpu.memory_space<vmem>>, vector<1x256x128xf32>
    %120 = vector.shape_cast %119 : vector<1x256x128xf32> to vector<256x128xf32>
    %cst_64 = arith.constant dense<0.000000e+00> : vector<8x128xf32>
    %121 = tpu.matmul %118, %120, %cst_64 {dimension_numbers = #tpu.dot_dimension_numbers<[1], [0], [0], [1], [0, 0, 1, 1], [], []>} : vector<8x256xf32>, vector<256x128xf32>, vector<8x128xf32> -> vector<8x128xf32>
    %122 = arith.addf %60, %121 : vector<8x128xf32>
    %c18 = arith.constant 18 : index
    %123 = memref.load %arg1[%c18] : memref<36xf32, #tpu.memory_space<smem>>
    %c0_65 = arith.constant 0 : index
    %c0_66 = arith.constant 0 : index
    %c0_67 = arith.constant 0 : index
    %124 = vector.load %arg3[%c0_65, %c0_66, %c0_67] : memref<9x8x256xf32, #tpu.memory_space<vmem>>, vector<1x8x256xf32>
    %125 = vector.shape_cast %124 : vector<1x8x256xf32> to vector<8x256xf32>
    %126 = vector.broadcast %123 : f32 to vector<8x256xf32>
    %127 = arith.mulf %126, %125 : vector<8x256xf32>
    %c19 = arith.constant 19 : index
    %128 = memref.load %arg1[%c19] : memref<36xf32, #tpu.memory_space<smem>>
    %c1_68 = arith.constant 1 : index
    %c0_69 = arith.constant 0 : index
    %c0_70 = arith.constant 0 : index
    %129 = vector.load %arg3[%c1_68, %c0_69, %c0_70] : memref<9x8x256xf32, #tpu.memory_space<vmem>>, vector<1x8x256xf32>
    %130 = vector.shape_cast %129 : vector<1x8x256xf32> to vector<8x256xf32>
    %131 = vector.broadcast %128 : f32 to vector<8x256xf32>
    %132 = arith.mulf %131, %130 : vector<8x256xf32>
    %133 = arith.addf %127, %132 : vector<8x256xf32>
    %c20 = arith.constant 20 : index
    %134 = memref.load %arg1[%c20] : memref<36xf32, #tpu.memory_space<smem>>
    %c2_71 = arith.constant 2 : index
    %c0_72 = arith.constant 0 : index
    %c0_73 = arith.constant 0 : index
    %135 = vector.load %arg3[%c2_71, %c0_72, %c0_73] : memref<9x8x256xf32, #tpu.memory_space<vmem>>, vector<1x8x256xf32>
    %136 = vector.shape_cast %135 : vector<1x8x256xf32> to vector<8x256xf32>
    %137 = vector.broadcast %134 : f32 to vector<8x256xf32>
    %138 = arith.mulf %137, %136 : vector<8x256xf32>
    %139 = arith.addf %133, %138 : vector<8x256xf32>
    %c21 = arith.constant 21 : index
    %140 = memref.load %arg1[%c21] : memref<36xf32, #tpu.memory_space<smem>>
    %c3_74 = arith.constant 3 : index
    %c0_75 = arith.constant 0 : index
    %c0_76 = arith.constant 0 : index
    %141 = vector.load %arg3[%c3_74, %c0_75, %c0_76] : memref<9x8x256xf32, #tpu.memory_space<vmem>>, vector<1x8x256xf32>
    %142 = vector.shape_cast %141 : vector<1x8x256xf32> to vector<8x256xf32>
    %143 = vector.broadcast %140 : f32 to vector<8x256xf32>
    %144 = arith.mulf %143, %142 : vector<8x256xf32>
    %145 = arith.addf %139, %144 : vector<8x256xf32>
    %c22 = arith.constant 22 : index
    %146 = memref.load %arg1[%c22] : memref<36xf32, #tpu.memory_space<smem>>
    %c4_77 = arith.constant 4 : index
    %c0_78 = arith.constant 0 : index
    %c0_79 = arith.constant 0 : index
    %147 = vector.load %arg3[%c4_77, %c0_78, %c0_79] : memref<9x8x256xf32, #tpu.memory_space<vmem>>, vector<1x8x256xf32>
    %148 = vector.shape_cast %147 : vector<1x8x256xf32> to vector<8x256xf32>
    %149 = vector.broadcast %146 : f32 to vector<8x256xf32>
    %150 = arith.mulf %149, %148 : vector<8x256xf32>
    %151 = arith.addf %145, %150 : vector<8x256xf32>
    %c23 = arith.constant 23 : index
    %152 = memref.load %arg1[%c23] : memref<36xf32, #tpu.memory_space<smem>>
    %c5_80 = arith.constant 5 : index
    %c0_81 = arith.constant 0 : index
    %c0_82 = arith.constant 0 : index
    %153 = vector.load %arg3[%c5_80, %c0_81, %c0_82] : memref<9x8x256xf32, #tpu.memory_space<vmem>>, vector<1x8x256xf32>
    %154 = vector.shape_cast %153 : vector<1x8x256xf32> to vector<8x256xf32>
    %155 = vector.broadcast %152 : f32 to vector<8x256xf32>
    %156 = arith.mulf %155, %154 : vector<8x256xf32>
    %157 = arith.addf %151, %156 : vector<8x256xf32>
    %c24 = arith.constant 24 : index
    %158 = memref.load %arg1[%c24] : memref<36xf32, #tpu.memory_space<smem>>
    %c6_83 = arith.constant 6 : index
    %c0_84 = arith.constant 0 : index
    %c0_85 = arith.constant 0 : index
    %159 = vector.load %arg3[%c6_83, %c0_84, %c0_85] : memref<9x8x256xf32, #tpu.memory_space<vmem>>, vector<1x8x256xf32>
    %160 = vector.shape_cast %159 : vector<1x8x256xf32> to vector<8x256xf32>
    %161 = vector.broadcast %158 : f32 to vector<8x256xf32>
    %162 = arith.mulf %161, %160 : vector<8x256xf32>
    %163 = arith.addf %157, %162 : vector<8x256xf32>
    %c25 = arith.constant 25 : index
    %164 = memref.load %arg1[%c25] : memref<36xf32, #tpu.memory_space<smem>>
    %c7_86 = arith.constant 7 : index
    %c0_87 = arith.constant 0 : index
    %c0_88 = arith.constant 0 : index
    %165 = vector.load %arg3[%c7_86, %c0_87, %c0_88] : memref<9x8x256xf32, #tpu.memory_space<vmem>>, vector<1x8x256xf32>
    %166 = vector.shape_cast %165 : vector<1x8x256xf32> to vector<8x256xf32>
    %167 = vector.broadcast %164 : f32 to vector<8x256xf32>
    %168 = arith.mulf %167, %166 : vector<8x256xf32>
    %169 = arith.addf %163, %168 : vector<8x256xf32>
    %c26 = arith.constant 26 : index
    %170 = memref.load %arg1[%c26] : memref<36xf32, #tpu.memory_space<smem>>
    %c8_89 = arith.constant 8 : index
    %c0_90 = arith.constant 0 : index
    %c0_91 = arith.constant 0 : index
    %171 = vector.load %arg3[%c8_89, %c0_90, %c0_91] : memref<9x8x256xf32, #tpu.memory_space<vmem>>, vector<1x8x256xf32>
    %172 = vector.shape_cast %171 : vector<1x8x256xf32> to vector<8x256xf32>
    %173 = vector.broadcast %170 : f32 to vector<8x256xf32>
    %174 = arith.mulf %173, %172 : vector<8x256xf32>
    %175 = arith.addf %169, %174 : vector<8x256xf32>
    %c2_92 = arith.constant 2 : index
    %176 = memref.load %arg2[%c2_92] : memref<4xf32, #tpu.memory_space<smem>>
    %177 = vector.broadcast %176 : f32 to vector<8x256xf32>
    %178 = arith.addf %175, %177 : vector<8x256xf32>
    %cst_93 = arith.constant 0.000000e+00 : f32
    %179 = vector.broadcast %cst_93 : f32 to vector<8x256xf32>
    %180 = arith.maximumf %178, %179 : vector<8x256xf32>
    %c2_94 = arith.constant 2 : index
    %c0_95 = arith.constant 0 : index
    %c0_96 = arith.constant 0 : index
    %181 = vector.load %arg4[%c2_94, %c0_95, %c0_96] : memref<4x256x128xf32, #tpu.memory_space<vmem>>, vector<1x256x128xf32>
    %182 = vector.shape_cast %181 : vector<1x256x128xf32> to vector<256x128xf32>
    %cst_97 = arith.constant dense<0.000000e+00> : vector<8x128xf32>
    %183 = tpu.matmul %180, %182, %cst_97 {dimension_numbers = #tpu.dot_dimension_numbers<[1], [0], [0], [1], [0, 0, 1, 1], [], []>} : vector<8x256xf32>, vector<256x128xf32>, vector<8x128xf32> -> vector<8x128xf32>
    %184 = arith.addf %122, %183 : vector<8x128xf32>
    %c27 = arith.constant 27 : index
    %185 = memref.load %arg1[%c27] : memref<36xf32, #tpu.memory_space<smem>>
    %c0_98 = arith.constant 0 : index
    %c0_99 = arith.constant 0 : index
    %c0_100 = arith.constant 0 : index
    %186 = vector.load %arg3[%c0_98, %c0_99, %c0_100] : memref<9x8x256xf32, #tpu.memory_space<vmem>>, vector<1x8x256xf32>
    %187 = vector.shape_cast %186 : vector<1x8x256xf32> to vector<8x256xf32>
    %188 = vector.broadcast %185 : f32 to vector<8x256xf32>
    %189 = arith.mulf %188, %187 : vector<8x256xf32>
    %c28 = arith.constant 28 : index
    %190 = memref.load %arg1[%c28] : memref<36xf32, #tpu.memory_space<smem>>
    %c1_101 = arith.constant 1 : index
    %c0_102 = arith.constant 0 : index
    %c0_103 = arith.constant 0 : index
    %191 = vector.load %arg3[%c1_101, %c0_102, %c0_103] : memref<9x8x256xf32, #tpu.memory_space<vmem>>, vector<1x8x256xf32>
    %192 = vector.shape_cast %191 : vector<1x8x256xf32> to vector<8x256xf32>
    %193 = vector.broadcast %190 : f32 to vector<8x256xf32>
    %194 = arith.mulf %193, %192 : vector<8x256xf32>
    %195 = arith.addf %189, %194 : vector<8x256xf32>
    %c29 = arith.constant 29 : index
    %196 = memref.load %arg1[%c29] : memref<36xf32, #tpu.memory_space<smem>>
    %c2_104 = arith.constant 2 : index
    %c0_105 = arith.constant 0 : index
    %c0_106 = arith.constant 0 : index
    %197 = vector.load %arg3[%c2_104, %c0_105, %c0_106] : memref<9x8x256xf32, #tpu.memory_space<vmem>>, vector<1x8x256xf32>
    %198 = vector.shape_cast %197 : vector<1x8x256xf32> to vector<8x256xf32>
    %199 = vector.broadcast %196 : f32 to vector<8x256xf32>
    %200 = arith.mulf %199, %198 : vector<8x256xf32>
    %201 = arith.addf %195, %200 : vector<8x256xf32>
    %c30 = arith.constant 30 : index
    %202 = memref.load %arg1[%c30] : memref<36xf32, #tpu.memory_space<smem>>
    %c3_107 = arith.constant 3 : index
    %c0_108 = arith.constant 0 : index
    %c0_109 = arith.constant 0 : index
    %203 = vector.load %arg3[%c3_107, %c0_108, %c0_109] : memref<9x8x256xf32, #tpu.memory_space<vmem>>, vector<1x8x256xf32>
    %204 = vector.shape_cast %203 : vector<1x8x256xf32> to vector<8x256xf32>
    %205 = vector.broadcast %202 : f32 to vector<8x256xf32>
    %206 = arith.mulf %205, %204 : vector<8x256xf32>
    %207 = arith.addf %201, %206 : vector<8x256xf32>
    %c31 = arith.constant 31 : index
    %208 = memref.load %arg1[%c31] : memref<36xf32, #tpu.memory_space<smem>>
    %c4_110 = arith.constant 4 : index
    %c0_111 = arith.constant 0 : index
    %c0_112 = arith.constant 0 : index
    %209 = vector.load %arg3[%c4_110, %c0_111, %c0_112] : memref<9x8x256xf32, #tpu.memory_space<vmem>>, vector<1x8x256xf32>
    %210 = vector.shape_cast %209 : vector<1x8x256xf32> to vector<8x256xf32>
    %211 = vector.broadcast %208 : f32 to vector<8x256xf32>
    %212 = arith.mulf %211, %210 : vector<8x256xf32>
    %213 = arith.addf %207, %212 : vector<8x256xf32>
    %c32 = arith.constant 32 : index
    %214 = memref.load %arg1[%c32] : memref<36xf32, #tpu.memory_space<smem>>
    %c5_113 = arith.constant 5 : index
    %c0_114 = arith.constant 0 : index
    %c0_115 = arith.constant 0 : index
    %215 = vector.load %arg3[%c5_113, %c0_114, %c0_115] : memref<9x8x256xf32, #tpu.memory_space<vmem>>, vector<1x8x256xf32>
    %216 = vector.shape_cast %215 : vector<1x8x256xf32> to vector<8x256xf32>
    %217 = vector.broadcast %214 : f32 to vector<8x256xf32>
    %218 = arith.mulf %217, %216 : vector<8x256xf32>
    %219 = arith.addf %213, %218 : vector<8x256xf32>
    %c33 = arith.constant 33 : index
    %220 = memref.load %arg1[%c33] : memref<36xf32, #tpu.memory_space<smem>>
    %c6_116 = arith.constant 6 : index
    %c0_117 = arith.constant 0 : index
    %c0_118 = arith.constant 0 : index
    %221 = vector.load %arg3[%c6_116, %c0_117, %c0_118] : memref<9x8x256xf32, #tpu.memory_space<vmem>>, vector<1x8x256xf32>
    %222 = vector.shape_cast %221 : vector<1x8x256xf32> to vector<8x256xf32>
    %223 = vector.broadcast %220 : f32 to vector<8x256xf32>
    %224 = arith.mulf %223, %222 : vector<8x256xf32>
    %225 = arith.addf %219, %224 : vector<8x256xf32>
    %c34 = arith.constant 34 : index
    %226 = memref.load %arg1[%c34] : memref<36xf32, #tpu.memory_space<smem>>
    %c7_119 = arith.constant 7 : index
    %c0_120 = arith.constant 0 : index
    %c0_121 = arith.constant 0 : index
    %227 = vector.load %arg3[%c7_119, %c0_120, %c0_121] : memref<9x8x256xf32, #tpu.memory_space<vmem>>, vector<1x8x256xf32>
    %228 = vector.shape_cast %227 : vector<1x8x256xf32> to vector<8x256xf32>
    %229 = vector.broadcast %226 : f32 to vector<8x256xf32>
    %230 = arith.mulf %229, %228 : vector<8x256xf32>
    %231 = arith.addf %225, %230 : vector<8x256xf32>
    %c35 = arith.constant 35 : index
    %232 = memref.load %arg1[%c35] : memref<36xf32, #tpu.memory_space<smem>>
    %c8_122 = arith.constant 8 : index
    %c0_123 = arith.constant 0 : index
    %c0_124 = arith.constant 0 : index
    %233 = vector.load %arg3[%c8_122, %c0_123, %c0_124] : memref<9x8x256xf32, #tpu.memory_space<vmem>>, vector<1x8x256xf32>
    %234 = vector.shape_cast %233 : vector<1x8x256xf32> to vector<8x256xf32>
    %235 = vector.broadcast %232 : f32 to vector<8x256xf32>
    %236 = arith.mulf %235, %234 : vector<8x256xf32>
    %237 = arith.addf %231, %236 : vector<8x256xf32>
    %c3_125 = arith.constant 3 : index
    %238 = memref.load %arg2[%c3_125] : memref<4xf32, #tpu.memory_space<smem>>
    %239 = vector.broadcast %238 : f32 to vector<8x256xf32>
    %240 = arith.addf %237, %239 : vector<8x256xf32>
    %cst_126 = arith.constant 0.000000e+00 : f32
    %241 = vector.broadcast %cst_126 : f32 to vector<8x256xf32>
    %242 = arith.maximumf %240, %241 : vector<8x256xf32>
    %c3_127 = arith.constant 3 : index
    %c0_128 = arith.constant 0 : index
    %c0_129 = arith.constant 0 : index
    %243 = vector.load %arg4[%c3_127, %c0_128, %c0_129] : memref<4x256x128xf32, #tpu.memory_space<vmem>>, vector<1x256x128xf32>
    %244 = vector.shape_cast %243 : vector<1x256x128xf32> to vector<256x128xf32>
    %cst_130 = arith.constant dense<0.000000e+00> : vector<8x128xf32>
    %245 = tpu.matmul %242, %244, %cst_130 {dimension_numbers = #tpu.dot_dimension_numbers<[1], [0], [0], [1], [0, 0, 1, 1], [], []>} : vector<8x256xf32>, vector<256x128xf32>, vector<8x128xf32> -> vector<8x128xf32>
    %246 = arith.addf %184, %245 : vector<8x128xf32>
    %c0_131 = arith.constant 0 : index
    %c0_132 = arith.constant 0 : index
    %247 = vector.load %arg5[%c0_131, %c0_132] : memref<1x128xf32, #tpu.memory_space<vmem>>, vector<1x128xf32>
    %248 = vector.broadcast %247 : vector<1x128xf32> to vector<8x128xf32>
    %249 = arith.addf %246, %248 : vector<8x128xf32>
    %cst_133 = arith.constant 0.000000e+00 : f32
    %250 = vector.broadcast %cst_133 : f32 to vector<8x128xf32>
    %251 = arith.maximumf %249, %250 : vector<8x128xf32>
    %c0_134 = arith.constant 0 : index
    %c0_135 = arith.constant 0 : index
    %252 = vector.load %arg6[%c0_134, %c0_135] : memref<128x128xf32, #tpu.memory_space<vmem>>, vector<128x128xf32>
    %cst_136 = arith.constant dense<0.000000e+00> : vector<8x128xf32>
    %253 = tpu.matmul %251, %252, %cst_136 {dimension_numbers = #tpu.dot_dimension_numbers<[1], [0], [0], [1], [0, 0, 1, 1], [], []>} : vector<8x128xf32>, vector<128x128xf32>, vector<8x128xf32> -> vector<8x128xf32>
    %c0_137 = arith.constant 0 : index
    %c0_138 = arith.constant 0 : index
    %254 = vector.load %arg7[%c0_137, %c0_138] : memref<1x128xf32, #tpu.memory_space<vmem>>, vector<1x128xf32>
    %255 = vector.broadcast %254 : vector<1x128xf32> to vector<8x128xf32>
    %256 = arith.addf %253, %255 : vector<8x128xf32>
    %257 = tpu.iota {dimensions = array<i32: 1>} : vector<8x128xi32>
    %c2_i32 = arith.constant 2 : i32
    %258 = vector.broadcast %c2_i32 : i32 to vector<8x128xi32>
    %259 = arith.cmpi slt, %257, %258 : vector<8x128xi32>
    %cst_139 = arith.constant 0xFF800000 : f32
    %260 = vector.broadcast %cst_139 : f32 to vector<8x128xf32>
    %261 = arith.select %259, %256, %260 : vector<8x128xi1>, vector<8x128xf32>
    %cst_140 = arith.constant dense<0xFF800000> : vector<8xf32>
    %262 = vector.multi_reduction <maximumf>, %261, %cst_140 [1] : vector<8x128xf32> to vector<8xf32>
    %263 = vector.shape_cast %262 : vector<8xf32> to vector<8x1xf32>
    %264 = vector.broadcast %263 : vector<8x1xf32> to vector<8x128xf32>
    %265 = arith.subf %261, %264 : vector<8x128xf32>
    %266 = math.exp %265 : vector<8x128xf32>
    %cst_141 = arith.constant dense<0.000000e+00> : vector<8xf32>
    %267 = vector.multi_reduction <add>, %266, %cst_141 [1] : vector<8x128xf32> to vector<8xf32>
    %268 = vector.shape_cast %267 : vector<8xf32> to vector<8x1xf32>
    %269 = math.log %268 : vector<8x1xf32>
    %270 = arith.addf %269, %263 : vector<8x1xf32>
    %271 = vector.broadcast %270 : vector<8x1xf32> to vector<8x128xf32>
    %272 = arith.subf %256, %271 : vector<8x128xf32>
    %c0_142 = arith.constant 0 : index
    %c0_143 = arith.constant 0 : index
    %273 = vector.load %arg8[%c0_142, %c0_143] : memref<8x128xf32, #tpu.memory_space<vmem>>, vector<8x128xf32>
    tpu.vector_store %arg8[%c0_142, %c0_143], %272 {strides = array<i32>} : memref<8x128xf32, #tpu.memory_space<vmem>>, vector<8x128xf32>,
    return
  }
  func.func @transform_0(%arg0: i32) -> i32 {
    %c0_i32 = arith.constant 0 : i32
    %c0_i32_0 = arith.constant 0 : i32
    return %c0_i32 : i32
  }
  func.func @transform_1(%arg0: i32) -> i32 {
    %c0_i32 = arith.constant 0 : i32
    %c0_i32_0 = arith.constant 0 : i32
    return %c0_i32 : i32
  }
  func.func @transform_2(%arg0: i32) -> (i32, i32, i32) {
    %c0_i32 = arith.constant 0 : i32
    %c0_i32_0 = arith.constant 0 : i32
    %c0_i32_1 = arith.constant 0 : i32
    return %c0_i32, %arg0, %c0_i32_0 : i32, i32, i32
  }
  func.func @transform_3(%arg0: i32) -> (i32, i32, i32) {
    %c0_i32 = arith.constant 0 : i32
    %c0_i32_0 = arith.constant 0 : i32
    %c0_i32_1 = arith.constant 0 : i32
    %c0_i32_2 = arith.constant 0 : i32
    return %c0_i32, %c0_i32_0, %c0_i32_1 : i32, i32, i32
  }
  func.func @transform_4(%arg0: i32) -> (i32, i32) {
    %c0_i32 = arith.constant 0 : i32
    %c0_i32_0 = arith.constant 0 : i32
    %c0_i32_1 = arith.constant 0 : i32
    return %c0_i32, %c0_i32_0 : i32, i32
  }
  func.func @transform_5(%arg0: i32) -> (i32, i32) {
    %c0_i32 = arith.constant 0 : i32
    %c0_i32_0 = arith.constant 0 : i32
    %c0_i32_1 = arith.constant 0 : i32
    return %c0_i32, %c0_i32_0 : i32, i32
  }
  func.func @transform_6(%arg0: i32) -> (i32, i32) {
    %c0_i32 = arith.constant 0 : i32
    %c0_i32_0 = arith.constant 0 : i32
    %c0_i32_1 = arith.constant 0 : i32
    return %c0_i32, %c0_i32_0 : i32, i32
  }
  func.func @transform_7(%arg0: i32) -> (i32, i32) {
    %c0_i32 = arith.constant 0 : i32
    %c0_i32_0 = arith.constant 0 : i32
    return %arg0, %c0_i32 : i32, i32
  }
}

</mosaic_0001>

<llo_original>
// kernel: squeeze.9
$region0: #{squeeze.9}
  %s0 = inlined_call_operand.vmem [shape: f32[1,8,14,14], index: 0, kind: input, shape index: {}]
  %s1 = inlined_call_operand.vmem [shape: f32[1,8,196], index: 1, kind: output, shape index: {}]
  %s2 = smov 3
  %v3 = vld [vmem:[%s0] ss:$16 sm:%s2]
  %s4 = smov 12
  %v5 = vld [vmem:[%s0] ss:$16 sm:%s4]
  %vm6 = vcmask 1043458
  %v7 = vsel %vm6, %v5, %v3
  %s8 = smov 48
  %v9 = vld [vmem:[%s0] ss:$16 sm:%s8]
  %vm10 = vcmask 1045508
  %v11 = vsel %vm10, %v9, %v7
  %s12 = smov 192
  %v13 = vld [vmem:[%s0] ss:$16 sm:%s12]
  %vm14 = vcmask 1047558
  %v15 = vsel %vm14, %v13, %v11
  %vm16 = vcmask 113664
  %17 = vst.msk [vmem:[%s1] sm:$0xff] %vm16, %v15
  %s18 = scalar_lea.vmem %s0, 9
  %s19 = smov 3
  %v20 = vld [vmem:[%s18] ss:$16 sm:%s19]
  %s21 = scalar_lea.vmem %s0, 9
  %s22 = smov 12
  %v23 = vld [vmem:[%s21] ss:$16 sm:%s22]
  %vm24 = vcmask 1043458
  %v25 = vsel %vm24, %v23, %v20
  %s26 = scalar_lea.vmem %s0, 9
  %s27 = smov 48
  %v28 = vld [vmem:[%s26] ss:$16 sm:%s27]
  %vm29 = vcmask 1045508
  %v30 = vsel %vm29, %v28, %v25
  %s31 = scalar_lea.vmem %s0, 9
  %s32 = smov 192
  %v33 = vld [vmem:[%s31] ss:$16 sm:%s32]
  %vm34 = vcmask 1047558
  %v35 = vsel %vm34, %v33, %v30
  %s36 = scalar_lea.vmem %s0, 9
  %s37 = smov 3
  %v38 = vld [vmem:[%s36] ss:$16 sm:%s37]
  %s39 = scalar_lea.vmem %s0, 9
  %s40 = smov 12
  %v41 = vld [vmem:[%s39] ss:$16 sm:%s40]
  %vm42 = vcmask 1043458
  %v43 = vsel %vm42, %v41, %v38
  %s44 = scalar_lea.vmem %s0, 9
  %s45 = smov 48
  %v46 = vld [vmem:[%s44] ss:$16 sm:%s45]
  %vm47 = vcmask 1045508
  %v48 = vsel %vm47, %v46, %v43
  %s49 = scalar_lea.vmem %s0, 9
  %s50 = smov 192
  %v51 = vld [vmem:[%s49] ss:$16 sm:%s50]
  %vm52 = vcmask 1047558
  %v53 = vsel %vm52, %v51, %v48
  %vm54 = vcmask 15360
  %v55 = vsel %vm54, %v53, %v35
  %56 = vrot.lane.b32.xlu0 %v55, 126
  %v57 = vpop.permute.xlu0 %56
  %vm58 = vcmask 97280
  %s59 = scalar_lea.vmem %s1, 8
  %60 = vst.msk [vmem:[%s59] sm:$0xff] %vm58, %v57
  %vm61 = vcmask 1048560
  %62 = vst.msk [vmem:[%s1] sm:$0xff] %vm61, %v57
  %s63 = scalar_lea.vmem %s0, 8
  %s64 = smov 3
  %v65 = vld [vmem:[%s63] ss:$16 sm:%s64]
  %s66 = scalar_lea.vmem %s0, 8
  %s67 = smov 12
  %v68 = vld [vmem:[%s66] ss:$16 sm:%s67]
  %vm69 = vcmask 1043458
  %v70 = vsel %vm69, %v68, %v65
  %s71 = scalar_lea.vmem %s0, 8
  %s72 = smov 48
  %v73 = vld [vmem:[%s71] ss:$16 sm:%s72]
  %vm74 = vcmask 1045508
  %v75 = vsel %vm74, %v73, %v70
  %s76 = scalar_lea.vmem %s0, 8
  %s77 = smov 192
  %v78 = vld [vmem:[%s76] ss:$16 sm:%s77]
  %vm79 = vcmask 1047558
  %v80 = vsel %vm79, %v78, %v75
  %81 = vrot.lane.b32.xlu0 %v80, 112
  %v82 = vpop.permute.xlu0 %81
  %vm83 = vcmask 1032064
  %84 = vst.msk [vmem:[%s1] sm:$0xff] %vm83, %v82
  %s85 = scalar_lea.vmem %s0, 7
  %s86 = smov 3
  %v87 = vld [vmem:[%s85] ss:$16 sm:%s86]
  %s88 = scalar_lea.vmem %s0, 7
  %s89 = smov 12
  %v90 = vld [vmem:[%s88] ss:$16 sm:%s89]
  %vm91 = vcmask 1043458
  %v92 = vsel %vm91, %v90, %v87
  %s93 = scalar_lea.vmem %s0, 7
  %s94 = smov 48
  %v95 = vld [vmem:[%s93] ss:$16 sm:%s94]
  %vm96 = vcmask 1045508
  %v97 = vsel %vm96, %v95, %v92
  %s98 = scalar_lea.vmem %s0, 7
  %s99 = smov 192
  %v100 = vld [vmem:[%s98] ss:$16 sm:%s99]
  %vm101 = vcmask 1047558
  %v102 = vsel %vm101, %v100, %v97
  %103 = vrot.lane.b32.xlu0 %v102, 98
  %v104 = vpop.permute.xlu0 %103
  %vm105 = vcmask 917264
  %106 = vst.msk [vmem:[%s1] sm:$0xff] %vm105, %v104
  %s107 = scalar_lea.vmem %s0, 6
  %s108 = smov 3
  %v109 = vld [vmem:[%s107] ss:$16 sm:%s108]
  %s110 = scalar_lea.vmem %s0, 6
  %s111 = smov 12
  %v112 = vld [vmem:[%s110] ss:$16 sm:%s111]
  %vm113 = vcmask 1043458
  %v114 = vsel %vm113, %v112, %v109
  %s115 = scalar_lea.vmem %s0, 6
  %s116 = smov 48
  %v117 = vld [vmem:[%s115] ss:$16 sm:%s116]
  %vm118 = vcmask 1045508
  %v119 = vsel %vm118, %v117, %v114
  %s120 = scalar_lea.vmem %s0, 6
  %s121 = smov 192
  %v122 = vld [vmem:[%s120] ss:$16 sm:%s121]
  %vm123 = vcmask 1047558
  %v124 = vsel %vm123, %v122, %v119
  %125 = vrot.lane.b32.xlu0 %v124, 84
  %v126 = vpop.permute.xlu0 %125
  %vm127 = vcmask 802464
  %128 = vst.msk [vmem:[%s1] sm:$0xff] %vm127, %v126
  %s129 = scalar_lea.vmem %s0, 5
  %s130 = smov 3
  %v131 = vld [vmem:[%s129] ss:$16 sm:%s130]
  %s132 = scalar_lea.vmem %s0, 5
  %s133 = smov 12
  %v134 = vld [vmem:[%s132] ss:$16 sm:%s133]
  %vm135 = vcmask 1043458
  %v136 = vsel %vm135, %v134, %v131
  %s137 = scalar_lea.vmem %s0, 5
  %s138 = smov 48
  %v139 = vld [vmem:[%s137] ss:$16 sm:%s138]
  %vm140 = vcmask 1045508
  %v141 = vsel %vm140, %v139, %v136
  %s142 = scalar_lea.vmem %s0, 5
  %s143 = smov 192
  %v144 = vld [vmem:[%s142] ss:$16 sm:%s143]
  %vm145 = vcmask 1047558
  %v146 = vsel %vm145, %v144, %v141
  %147 = vrot.lane.b32.xlu0 %v146, 70
  %v148 = vpop.permute.xlu0 %147
  %vm149 = vcmask 687664
  %150 = vst.msk [vmem:[%s1] sm:$0xff] %vm149, %v148
  %s151 = scalar_lea.vmem %s0, 4
  %s152 = smov 3
  %v153 = vld [vmem:[%s151] ss:$16 sm:%s152]
  %s154 = scalar_lea.vmem %s0, 4
  %s155 = smov 12
  %v156 = vld [vmem:[%s154] ss:$16 sm:%s155]
  %vm157 = vcmask 1043458
  %v158 = vsel %vm157, %v156, %v153
  %s159 = scalar_lea.vmem %s0, 4
  %s160 = smov 48
  %v161 = vld [vmem:[%s159] ss:$16 sm:%s160]
  %vm162 = vcmask 1045508
  %v163 = vsel %vm162, %v161, %v158
  %s164 = scalar_lea.vmem %s0, 4
  %s165 = smov 192
  %v166 = vld [vmem:[%s164] ss:$16 sm:%s165]
  %vm167 = vcmask 1047558
  %v168 = vsel %vm167, %v166, %v163
  %169 = vrot.lane.b32.xlu0 %v168, 56
  %v170 = vpop.permute.xlu0 %169
  %vm171 = vcmask 572864
  %172 = vst.msk [vmem:[%s1] sm:$0xff] %vm171, %v170
  %s173 = scalar_lea.vmem %s0, 13
  %s174 = smov 3
  %v175 = vld [vmem:[%s173] ss:$16 sm:%s174]
  %s176 = scalar_lea.vmem %s0, 13
  %s177 = smov 12
  %v178 = vld [vmem:[%s176] ss:$16 sm:%s177]
  %vm179 = vcmask 1043458
  %v180 = vsel %vm179, %v178, %v175
  %s181 = scalar_lea.vmem %s0, 13
  %s182 = smov 48
  %v183 = vld [vmem:[%s181] ss:$16 sm:%s182]
  %vm184 = vcmask 1045508
  %v185 = vsel %vm184, %v183, %v180
  %s186 = scalar_lea.vmem %s0, 13
  %s187 = smov 192
  %v188 = vld [vmem:[%s186] ss:$16 sm:%s187]
  %vm189 = vcmask 1047558
  %v190 = vsel %vm189, %v188, %v185
  %191 = vrot.lane.b32.xlu0 %v190, 54
  %v192 = vpop.permute.xlu0 %191
  %vm193 = vcmask 556464
  %s194 = scalar_lea.vmem %s1, 8
  %195 = vst.msk [vmem:[%s194] sm:$0xff] %vm193, %v192
  %s196 = scalar_lea.vmem %s0, 3
  %s197 = smov 3
  %v198 = vld [vmem:[%s196] ss:$16 sm:%s197]
  %s199 = scalar_lea.vmem %s0, 3
  %s200 = smov 12
  %v201 = vld [vmem:[%s199] ss:$16 sm:%s200]
  %vm202 = vcmask 1043458
  %v203 = vsel %vm202, %v201, %v198
  %s204 = scalar_lea.vmem %s0, 3
  %s205 = smov 48
  %v206 = vld [vmem:[%s204] ss:$16 sm:%s205]
  %vm207 = vcmask 1045508
  %v208 = vsel %vm207, %v206, %v203
  %s209 = scalar_lea.vmem %s0, 3
  %s210 = smov 192
  %v211 = vld [vmem:[%s209] ss:$16 sm:%s210]
  %vm212 = vcmask 1047558
  %v213 = vsel %vm212, %v211, %v208
  %214 = vrot.lane.b32.xlu0 %v213, 42
  %v215 = vpop.permute.xlu0 %214
  %vm216 = vcmask 458064
  %217 = vst.msk [vmem:[%s1] sm:$0xff] %vm216, %v215
  %s218 = scalar_lea.vmem %s0, 12
  %s219 = smov 3
  %v220 = vld [vmem:[%s218] ss:$16 sm:%s219]
  %s221 = scalar_lea.vmem %s0, 12
  %s222 = smov 12
  %v223 = vld [vmem:[%s221] ss:$16 sm:%s222]
  %vm224 = vcmask 1043458
  %v225 = vsel %vm224, %v223, %v220
  %s226 = scalar_lea.vmem %s0, 12
  %s227 = smov 48
  %v228 = vld [vmem:[%s226] ss:$16 sm:%s227]
  %vm229 = vcmask 1045508
  %v230 = vsel %vm229, %v228, %v225
  %s231 = scalar_lea.vmem %s0, 12
  %s232 = smov 192
  %v233 = vld [vmem:[%s231] ss:$16 sm:%s232]
  %vm234 = vcmask 1047558
  %v235 = vsel %vm234, %v233, %v230
  %236 = vrot.lane.b32.xlu0 %v235, 40
  %v237 = vpop.permute.xlu0 %236
  %vm238 = vcmask 441664
  %s239 = scalar_lea.vmem %s1, 8
  %240 = vst.msk [vmem:[%s239] sm:$0xff] %vm238, %v237
  %s241 = scalar_lea.vmem %s0, 2
  %s242 = smov 3
  %v243 = vld [vmem:[%s241] ss:$16 sm:%s242]
  %s244 = scalar_lea.vmem %s0, 2
  %s245 = smov 12
  %v246 = vld [vmem:[%s244] ss:$16 sm:%s245]
  %vm247 = vcmask 1043458
  %v248 = vsel %vm247, %v246, %v243
  %s249 = scalar_lea.vmem %s0, 2
  %s250 = smov 48
  %v251 = vld [vmem:[%s249] ss:$16 sm:%s250]
  %vm252 = vcmask 1045508
  %v253 = vsel %vm252, %v251, %v248
  %s254 = scalar_lea.vmem %s0, 2
  %s255 = smov 192
  %v256 = vld [vmem:[%s254] ss:$16 sm:%s255]
  %vm257 = vcmask 1047558
  %v258 = vsel %vm257, %v256, %v253
  %259 = vrot.lane.b32.xlu0 %v258, 28
  %v260 = vpop.permute.xlu0 %259
  %vm261 = vcmask 343264
  %262 = vst.msk [vmem:[%s1] sm:$0xff] %vm261, %v260
  %s263 = scalar_lea.vmem %s0, 11
  %s264 = smov 3
  %v265 = vld [vmem:[%s263] ss:$16 sm:%s264]
  %s266 = scalar_lea.vmem %s0, 11
  %s267 = smov 12
  %v268 = vld [vmem:[%s266] ss:$16 sm:%s267]
  %vm269 = vcmask 1043458
  %v270 = vsel %vm269, %v268, %v265
  %s271 = scalar_lea.vmem %s0, 11
  %s272 = smov 48
  %v273 = vld [vmem:[%s271] ss:$16 sm:%s272]
  %vm274 = vcmask 1045508
  %v275 = vsel %vm274, %v273, %v270
  %s276 = scalar_lea.vmem %s0, 11
  %s277 = smov 192
  %v278 = vld [vmem:[%s276] ss:$16 sm:%s277]
  %vm279 = vcmask 1047558
  %v280 = vsel %vm279, %v278, %v275
  %281 = vrot.lane.b32.xlu0 %v280, 26
  %v282 = vpop.permute.xlu0 %281
  %vm283 = vcmask 326864
  %s284 = scalar_lea.vmem %s1, 8
  %285 = vst.msk [vmem:[%s284] sm:$0xff] %vm283, %v282
  %s286 = scalar_lea.vmem %s0, 1
  %s287 = smov 3
  %v288 = vld [vmem:[%s286] ss:$16 sm:%s287]
  %s289 = scalar_lea.vmem %s0, 1
  %s290 = smov 12
  %v291 = vld [vmem:[%s289] ss:$16 sm:%s290]
  %vm292 = vcmask 1043458
  %v293 = vsel %vm292, %v291, %v288
  %s294 = scalar_lea.vmem %s0, 1
  %s295 = smov 48
  %v296 = vld [vmem:[%s294] ss:$16 sm:%s295]
  %vm297 = vcmask 1045508
  %v298 = vsel %vm297, %v296, %v293
  %s299 = scalar_lea.vmem %s0, 1
  %s300 = smov 192
  %v301 = vld [vmem:[%s299] ss:$16 sm:%s300]
  %vm302 = vcmask 1047558
  %v303 = vsel %vm302, %v301, %v298
  %304 = vrot.lane.b32.xlu0 %v303, 14
  %v305 = vpop.permute.xlu0 %304
  %vm306 = vcmask 228464
  %307 = vst.msk [vmem:[%s1] sm:$0xff] %vm306, %v305
  %s308 = scalar_lea.vmem %s0, 10
  %s309 = smov 3
  %v310 = vld [vmem:[%s308] ss:$16 sm:%s309]
  %s311 = scalar_lea.vmem %s0, 10
  %s312 = smov 12
  %v313 = vld [vmem:[%s311] ss:$16 sm:%s312]
  %vm314 = vcmask 1043458
  %v315 = vsel %vm314, %v313, %v310
  %s316 = scalar_lea.vmem %s0, 10
  %s317 = smov 48
  %v318 = vld [vmem:[%s316] ss:$16 sm:%s317]
  %vm319 = vcmask 1045508
  %v320 = vsel %vm319, %v318, %v315
  %s321 = scalar_lea.vmem %s0, 10
  %s322 = smov 192
  %v323 = vld [vmem:[%s321] ss:$16 sm:%s322]
  %vm324 = vcmask 1047558
  %v325 = vsel %vm324, %v323, %v320
  %326 = vrot.lane.b32.xlu0 %v325, 12
  %v327 = vpop.permute.xlu0 %326
  %vm328 = vcmask 212064
  %s329 = scalar_lea.vmem %s1, 8
  %330 = vst.msk [vmem:[%s329] sm:$0xff] %vm328, %v327

// kernel: chennet_forward.1
$region0: #{chennet_forward.1}
  #allocation0 [shape = 'u32[]', space=smem, size = 0x4, offset = 0x4, fixed_abs, tag = 'smem constant byte address 0x4 - core index']
  #allocation1 [shape = 'u32[144,128]{1,0:T(1,128)}', space=vmem, size = 0x12000, scoped, tag = 'internal scratch']
  %s0 = inlined_call_operand.vmem [shape: f32[36], index: 0, kind: input, shape index: {}]
  %s1 = inlined_call_operand.vmem [shape: f32[4], index: 1, kind: input, shape index: {}]
  %s2 = inlined_call_operand.vmem [shape: f32[9,8,256], index: 2, kind: input, shape index: {}]
  %s3 = inlined_call_operand.vmem [shape: f32[4,256,128], index: 3, kind: input, shape index: {}]
  %s4 = inlined_call_operand.vmem [shape: f32[1,128], index: 4, kind: input, shape index: {}]
  %s5 = inlined_call_operand.vmem [shape: f32[128,128], index: 5, kind: input, shape index: {}]
  %s6 = inlined_call_operand.vmem [shape: f32[1,128], index: 6, kind: input, shape index: {}]
  %s7 = inlined_call_operand.vmem [shape: f32[8,128], index: 7, kind: output, shape index: {}]
  %s8 = sld [smem:[#allocation0]]
  $region46: #{chennet_forward.1} parent=0
    _
  %s10 = ssub.s32 1, %s8
  %s11 = scalar_select 0, %s10, %s8
  $region1: #{chennet_forward.1} parent=0
    #allocation2 [shape = 'u8[512]{0}', space=smem, size = 0x200, scoped, tag = 'input window, operand 0, single buffered']
    #allocation3 [shape = 's32[1]{0}', space=sflag, size = 0x4, scoped, tag = 'scoped memory for chennet_forward.1']
    #allocation4 [shape = 'u8[512]{0}', space=smem, size = 0x200, scoped, tag = 'input window, operand 1, single buffered']
    #allocation5 [shape = 's32[1]{0}', space=sflag, size = 0x4, scoped, tag = 'scoped memory for chennet_forward.1']
    %12 = vsyncpa [#allocation3], 0
    %13 = vsyncpa [#allocation5], 0
    // Predicated region
    $region2: #{chennet_forward.1} parent=1 // pred_check
      _
    $region3: #{chennet_forward.1} parent=1 // pred_check_branch
      %15 = sbr.rel (0) target = $region5
    $region4: #{chennet_forward.1} parent=1 // pred_region
      %s17 = ssub.s32 16, 16
      %18 = vsyncadd [#allocation3], %s17
      %s20 = sshll.u32 %s0, 4
      %s21 = int_to_ptr.vmem [resolvable:$true] %s20
      %23 = dma.vmem_to_smem %s21, 16, [#allocation2], [#allocation3]
    $region5: #{chennet_forward.1} parent=1 // pred_fallthru
      _
    // Predicated region
    $region6: #{chennet_forward.1} parent=1 // pred_check
      _
    $region7: #{chennet_forward.1} parent=1 // pred_check_branch
      %25 = sbr.rel (0) target = $region9
    $region8: #{chennet_forward.1} parent=1 // pred_region
      %s27 = ssub.s32 16, 16
      %28 = vsyncadd [#allocation5], %s27
      %s30 = sshll.u32 %s1, 4
      %s31 = int_to_ptr.vmem [resolvable:$true] %s30
      %33 = dma.vmem_to_smem %s31, 16, [#allocation4], [#allocation5]
    $region9: #{chennet_forward.1} parent=1 // pred_fallthru
      _
    // Predicated region
    $region10: #{chennet_forward.1} parent=1 // pred_check
      _
    $region11: #{chennet_forward.1} parent=1 // pred_check_branch
      %35 = sbr.rel (0) target = $region13
    $region12: #{chennet_forward.1} parent=1 // pred_region
      _
    $region13: #{chennet_forward.1} parent=1 // pred_fallthru
      _
    // Predicated region
    $region14: #{chennet_forward.1} parent=1 // pred_check
      _
    $region15: #{chennet_forward.1} parent=1 // pred_check_branch
      %37 = sbr.rel (0) target = $region17
    $region16: #{chennet_forward.1} parent=1 // pred_region
      _
    $region17: #{chennet_forward.1} parent=1 // pred_fallthru
      _
    // Predicated region
    $region18: #{chennet_forward.1} parent=1 // pred_check
      _
    $region19: #{chennet_forward.1} parent=1 // pred_check_branch
      %39 = sbr.rel (0) target = $region21
    $region20: #{chennet_forward.1} parent=1 // pred_region
      _
    $region21: #{chennet_forward.1} parent=1 // pred_fallthru
      _
    // Predicated region
    $region22: #{chennet_forward.1} parent=1 // pred_check
      _
    $region23: #{chennet_forward.1} parent=1 // pred_check_branch
      %41 = sbr.rel (0) target = $region25
    $region24: #{chennet_forward.1} parent=1 // pred_region
      _
    $region25: #{chennet_forward.1} parent=1 // pred_fallthru
      _
    // Predicated region
    $region26: #{chennet_forward.1} parent=1 // pred_check
      _
    $region27: #{chennet_forward.1} parent=1 // pred_check_branch
      %43 = sbr.rel (0) target = $region29
    $region28: #{chennet_forward.1} parent=1 // pred_region
      _
    $region29: #{chennet_forward.1} parent=1 // pred_fallthru
      _
    // Predicated region
    $region30: #{chennet_forward.1} parent=1 // pred_check
      _
    $region31: #{chennet_forward.1} parent=1 // pred_check_branch
      %45 = sbr.rel (0) target = $region33
    $region32: #{chennet_forward.1} parent=1 // pred_region
      %46 = dma.done [#allocation3], 16
    $region33: #{chennet_forward.1} parent=1 // pred_fallthru
      _
    // Predicated region
    $region34: #{chennet_forward.1} parent=1 // pred_check
      _
    $region35: #{chennet_forward.1} parent=1 // pred_check_branch
      %48 = sbr.rel (0) target = $region37
    $region36: #{chennet_forward.1} parent=1 // pred_region
      %49 = dma.done [#allocation5], 16
    $region37: #{chennet_forward.1} parent=1 // pred_fallthru
      _
    %50 = sfence
    %s51 = sld [smem:[#allocation2]]
    %v52 = vld [vmem:[%s2] sm:$0xff]
    %v53 = vld [vmem:[%s2 + $0x8] sm:$0xff]
    %v54 = vstv %s51
    %v55 = vmul.f32 %v54, %v52
    %v56 = vmul.f32 %v54, %v53
    %s57 = sld [smem:[#allocation2 + $0x1]]
    %s58 = scalar_lea.vmem %s2, 16
    %v59 = vld [vmem:[%s58] sm:$0xff]
    %v60 = vld [vmem:[%s58 + $0x8] sm:$0xff]
    %v61 = vstv %s57
    %v62 = vmul.f32 %v61, %v59
    %v63 = vmul.f32 %v61, %v60
    %v64 = vadd.f32 %v55, %v62
    %v65 = vadd.f32 %v56, %v63
    %s66 = sld [smem:[#allocation2 + $0x2]]
    %s67 = scalar_lea.vmem %s2, 32
    %v68 = vld [vmem:[%s67] sm:$0xff]
    %v69 = vld [vmem:[%s67 + $0x8] sm:$0xff]
    %v70 = vstv %s66
    %v71 = vmul.f32 %v70, %v68
    %v72 = vmul.f32 %v70, %v69
    %v73 = vadd.f32 %v64, %v71
    %v74 = vadd.f32 %v65, %v72
    %s75 = sld [smem:[#allocation2 + $0x3]]
    %s76 = scalar_lea.vmem %s2, 48
    %v77 = vld [vmem:[%s76] sm:$0xff]
    %v78 = vld [vmem:[%s76 + $0x8] sm:$0xff]
    %v79 = vstv %s75
    %v80 = vmul.f32 %v79, %v77
    %v81 = vmul.f32 %v79, %v78
    %v82 = vadd.f32 %v73, %v80
    %v83 = vadd.f32 %v74, %v81
    %s84 = sld [smem:[#allocation2 + $0x4]]
    %s85 = scalar_lea.vmem %s2, 64
    %v86 = vld [vmem:[%s85] sm:$0xff]
    %v87 = vld [vmem:[%s85 + $0x8] sm:$0xff]
    %v88 = vstv %s84
    %v89 = vmul.f32 %v88, %v86
    %v90 = vmul.f32 %v88, %v87
    %v91 = vadd.f32 %v82, %v89
    %v92 = vadd.f32 %v83, %v90
    %s93 = sld [smem:[#allocation2 + $0x5]]
    %s94 = scalar_lea.vmem %s2, 80
    %v95 = vld [vmem:[%s94] sm:$0xff]
    %v96 = vld [vmem:[%s94 + $0x8] sm:$0xff]
    %v97 = vstv %s93
    %v98 = vmul.f32 %v97, %v95
    %v99 = vmul.f32 %v97, %v96
    %v100 = vadd.f32 %v91, %v98
    %v101 = vadd.f32 %v92, %v99
    %s102 = sld [smem:[#allocation2 + $0x6]]
    %s103 = scalar_lea.vmem %s2, 96
    %v104 = vld [vmem:[%s103] sm:$0xff]
    %v105 = vld [vmem:[%s103 + $0x8] sm:$0xff]
    %v106 = vstv %s102
    %v107 = vmul.f32 %v106, %v104
    %v108 = vmul.f32 %v106, %v105
    %v109 = vadd.f32 %v100, %v107
    %v110 = vadd.f32 %v101, %v108
    %s111 = sld [smem:[#allocation2 + $0x7]]
    %s112 = scalar_lea.vmem %s2, 112
    %v113 = vld [vmem:[%s112] sm:$0xff]
    %v114 = vld [vmem:[%s112 + $0x8] sm:$0xff]
    %v115 = vstv %s111
    %v116 = vmul.f32 %v115, %v113
    %v117 = vmul.f32 %v115, %v114
    %v118 = vadd.f32 %v109, %v116
    %v119 = vadd.f32 %v110, %v117
    %s120 = sld [smem:[#allocation2 + $0x8]]
    %s121 = scalar_lea.vmem %s2, 128
    %v122 = vld [vmem:[%s121] sm:$0xff]
    %v123 = vld [vmem:[%s121 + $0x8] sm:$0xff]
    %v124 = vstv %s120
    %v125 = vmul.f32 %v124, %v122
    %v126 = vmul.f32 %v124, %v123
    %v127 = vadd.f32 %v118, %v125
    %v128 = vadd.f32 %v119, %v126
    %s129 = sld [smem:[#allocation4]]
    %v130 = vstv %s129
    %v131 = vadd.f32 %v127, %v130
    %v132 = vadd.f32 %v128, %v130
    %v133 = vmax.f32 %v131, 0.0
    %v134 = vmax.f32 %v132, 0.0
    %v135 = vld [vmem:[%s3] sm:$0xff]
    %v136 = vld [vmem:[%s3 + $0x8] sm:$0xff]
    %v137 = vld [vmem:[%s3 + $0x10] sm:$0xff]
    %v138 = vld [vmem:[%s3 + $0x18] sm:$0xff]
    %v139 = vld [vmem:[%s3 + $0x20] sm:$0xff]
    %v140 = vld [vmem:[%s3 + $0x28] sm:$0xff]
    %v141 = vld [vmem:[%s3 + $0x30] sm:$0xff]
    %v142 = vld [vmem:[%s3 + $0x38] sm:$0xff]
    %v143 = vld [vmem:[%s3 + $0x40] sm:$0xff]
    %v144 = vld [vmem:[%s3 + $0x48] sm:$0xff]
    %v145 = vld [vmem:[%s3 + $0x50] sm:$0xff]
    %v146 = vld [vmem:[%s3 + $0x58] sm:$0xff]
    %v147 = vld [vmem:[%s3 + $0x60] sm:$0xff]
    %v148 = vld [vmem:[%s3 + $0x68] sm:$0xff]
    %v149 = vld [vmem:[%s3 + $0x70] sm:$0xff]
    %v150 = vld [vmem:[%s3 + $0x78] sm:$0xff]
    %v151 = vld [vmem:[%s3 + $0x80] sm:$0xff]
    %v152 = vld [vmem:[%s3 + $0x88] sm:$0xff]
    %v153 = vld [vmem:[%s3 + $0x90] sm:$0xff]
    %v154 = vld [vmem:[%s3 + $0x98] sm:$0xff]
    %v155 = vld [vmem:[%s3 + $0xa0] sm:$0xff]
    %v156 = vld [vmem:[%s3 + $0xa8] sm:$0xff]
    %v157 = vld [vmem:[%s3 + $0xb0] sm:$0xff]
    %v158 = vld [vmem:[%s3 + $0xb8] sm:$0xff]
    %v159 = vld [vmem:[%s3 + $0xc0] sm:$0xff]
    %v160 = vld [vmem:[%s3 + $0xc8] sm:$0xff]
    %v161 = vld [vmem:[%s3 + $0xd0] sm:$0xff]
    %v162 = vld [vmem:[%s3 + $0xd8] sm:$0xff]
    %v163 = vld [vmem:[%s3 + $0xe0] sm:$0xff]
    %v164 = vld [vmem:[%s3 + $0xe8] sm:$0xff]
    %v165 = vld [vmem:[%s3 + $0xf0] sm:$0xff]
    %v166 = vld [vmem:[%s3 + $0xf8] sm:$0xff]
    %s167 = sld [smem:[#allocation2 + $0x9]]
    %v168 = vstv %s167
    %v169 = vmul.f32 %v168, %v52
    %v170 = vmul.f32 %v168, %v53
    %s171 = sld [smem:[#allocation2 + $0xa]]
    %v172 = vstv %s171
    %v173 = vmul.f32 %v172, %v59
    %v174 = vmul.f32 %v172, %v60
    %v175 = vadd.f32 %v169, %v173
    %v176 = vadd.f32 %v170, %v174
    %s177 = sld [smem:[#allocation2 + $0xb]]
    %v178 = vstv %s177
    %v179 = vmul.f32 %v178, %v68
    %v180 = vmul.f32 %v178, %v69
    %v181 = vadd.f32 %v175, %v179
    %v182 = vadd.f32 %v176, %v180
    %s183 = sld [smem:[#allocation2 + $0xc]]
    %v184 = vstv %s183
    %v185 = vmul.f32 %v184, %v77
    %v186 = vmul.f32 %v184, %v78
    %v187 = vadd.f32 %v181, %v185
    %v188 = vadd.f32 %v182, %v186
    %s189 = sld [smem:[#allocation2 + $0xd]]
    %v190 = vstv %s189
    %v191 = vmul.f32 %v190, %v86
    %v192 = vmul.f32 %v190, %v87
    %v193 = vadd.f32 %v187, %v191
    %v194 = vadd.f32 %v188, %v192
    %s195 = sld [smem:[#allocation2 + $0xe]]
    %v196 = vstv %s195
    %v197 = vmul.f32 %v196, %v95
    %v198 = vmul.f32 %v196, %v96
    %v199 = vadd.f32 %v193, %v197
    %v200 = vadd.f32 %v194, %v198
    %s201 = sld [smem:[#allocation2 + $0xf]]
    %v202 = vstv %s201
    %v203 = vmul.f32 %v202, %v104
    %v204 = vmul.f32 %v202, %v105
    %v205 = vadd.f32 %v199, %v203
    %v206 = vadd.f32 %v200, %v204
    %s207 = sld [smem:[#allocation2 + $0x10]]
    %v208 = vstv %s207
    %v209 = vmul.f32 %v208, %v113
    %v210 = vmul.f32 %v208, %v114
    %v211 = vadd.f32 %v205, %v209
    %v212 = vadd.f32 %v206, %v210
    %s213 = sld [smem:[#allocation2 + $0x11]]
    %v214 = vstv %s213
    %v215 = vmul.f32 %v214, %v122
    %v216 = vmul.f32 %v214, %v123
    %v217 = vadd.f32 %v211, %v215
    %v218 = vadd.f32 %v212, %v216
    %s219 = sld [smem:[#allocation4 + $0x1]]
    %v220 = vstv %s219
    %v221 = vadd.f32 %v217, %v220
    %v222 = vadd.f32 %v218, %v220
    %v223 = vmax.f32 %v221, 0.0
    %v224 = vmax.f32 %v222, 0.0
    %s225 = scalar_lea.vmem %s3, 256
    %v226 = vld [vmem:[%s225] sm:$0xff]
    %v227 = vld [vmem:[%s225 + $0x8] sm:$0xff]
    %v228 = vld [vmem:[%s225 + $0x10] sm:$0xff]
    %v229 = vld [vmem:[%s225 + $0x18] sm:$0xff]
    %v230 = vld [vmem:[%s225 + $0x20] sm:$0xff]
    %v231 = vld [vmem:[%s225 + $0x28] sm:$0xff]
    %v232 = vld [vmem:[%s225 + $0x30] sm:$0xff]
    %v233 = vld [vmem:[%s225 + $0x38] sm:$0xff]
    %v234 = vld [vmem:[%s225 + $0x40] sm:$0xff]
    %v235 = vld [vmem:[%s225 + $0x48] sm:$0xff]
    %v236 = vld [vmem:[%s225 + $0x50] sm:$0xff]
    %v237 = vld [vmem:[%s225 + $0x58] sm:$0xff]
    %v238 = vld [vmem:[%s225 + $0x60] sm:$0xff]
    %v239 = vld [vmem:[%s225 + $0x68] sm:$0xff]
    %v240 = vld [vmem:[%s225 + $0x70] sm:$0xff]
    %v241 = vld [vmem:[%s225 + $0x78] sm:$0xff]
    %v242 = vld [vmem:[%s225 + $0x80] sm:$0xff]
    %v243 = vld [vmem:[%s225 + $0x88] sm:$0xff]
    %v244 = vld [vmem:[%s225 + $0x90] sm:$0xff]
    %v245 = vld [vmem:[%s225 + $0x98] sm:$0xff]
    %v246 = vld [vmem:[%s225 + $0xa0] sm:$0xff]
    %v247 = vld [vmem:[%s225 + $0xa8] sm:$0xff]
    %v248 = vld [vmem:[%s225 + $0xb0] sm:$0xff]
    %v249 = vld [vmem:[%s225 + $0xb8] sm:$0xff]
    %v250 = vld [vmem:[%s225 + $0xc0] sm:$0xff]
    %v251 = vld [vmem:[%s225 + $0xc8] sm:$0xff]
    %v252 = vld [vmem:[%s225 + $0xd0] sm:$0xff]
    %v253 = vld [vmem:[%s225 + $0xd8] sm:$0xff]
    %v254 = vld [vmem:[%s225 + $0xe0] sm:$0xff]
    %v255 = vld [vmem:[%s225 + $0xe8] sm:$0xff]
    %v256 = vld [vmem:[%s225 + $0xf0] sm:$0xff]
    %v257 = vld [vmem:[%s225 + $0xf8] sm:$0xff]
    %258 = vmatprep.subr.mxu0 0.0
    %259 = vmatpush1.msra.mxu0 %v226
    %260 = vmatprep.subr.mxu0 0.0
    %261 = vmatpush1.msra.mxu0 %v227
    %262 = vmatprep.subr.mxu0 0.0
    %263 = vmatpush1.msra.mxu0 %v228
    %264 = vmatprep.subr.mxu0 0.0
    %265 = vmatpush1.msra.mxu0 %v229
    %266 = vmatprep.subr.mxu0 0.0
    %267 = vmatpush1.msra.mxu0 %v230
    %268 = vmatprep.subr.mxu0 0.0
    %269 = vmatpush1.msra.mxu0 %v231
    %270 = vmatprep.subr.mxu0 0.0
    %271 = vmatpush1.msra.mxu0 %v232
    %272 = vmatprep.subr.mxu0 0.0
    %273 = vmatpush1.msra.mxu0 %v233
    %274 = vmatprep.subr.mxu0 0.0
    %275 = vmatpush1.msra.mxu0 %v234
    %276 = vmatprep.subr.mxu0 0.0
    %277 = vmatpush1.msra.mxu0 %v235
    %278 = vmatprep.subr.mxu0 0.0
    %279 = vmatpush1.msra.mxu0 %v236
    %280 = vmatprep.subr.mxu0 0.0
    %281 = vmatpush1.msra.mxu0 %v237
    %282 = vmatprep.subr.mxu0 0.0
    %283 = vmatpush1.msra.mxu0 %v238
    %284 = vmatprep.subr.mxu0 0.0
    %285 = vmatpush1.msra.mxu0 %v239
    %286 = vmatprep.subr.mxu0 0.0
    %287 = vmatpush1.msra.mxu0 %v240
    %288 = vmatprep.subr.mxu0 0.0
    %289 = vmatpush1.msra.mxu0 %v241
    %290 = vmatprep.subr.mxu0 0.0
    %291 = vmatpush1.msra.mxu0 %v242
    %292 = vmatprep.subr.mxu0 0.0
    %293 = vmatpush1.msra.mxu0 %v243
    %294 = vmatprep.subr.mxu0 0.0
    %295 = vmatpush1.msra.mxu0 %v244
    %296 = vmatprep.subr.mxu0 0.0
    %297 = vmatpush1.msra.mxu0 %v245
    %298 = vmatprep.subr.mxu0 0.0
    %299 = vmatpush1.msra.mxu0 %v246
    %300 = vmatprep.subr.mxu0 0.0
    %301 = vmatpush1.msra.mxu0 %v247
    %302 = vmatprep.subr.mxu0 0.0
    %303 = vmatpush1.msra.mxu0 %v248
    %304 = vmatprep.subr.mxu0 0.0
    %305 = vmatpush1.msra.mxu0 %v249
    %306 = vmatprep.subr.mxu0 0.0
    %307 = vmatpush1.msra.mxu0 %v250
    %308 = vmatprep.subr.mxu0 0.0
    %309 = vmatpush1.msra.mxu0 %v251
    %310 = vmatprep.subr.mxu0 0.0
    %311 = vmatpush1.msra.mxu0 %v252
    %312 = vmatprep.subr.mxu0 0.0
    %313 = vmatpush1.msra.mxu0 %v253
    %314 = vmatprep.subr.mxu0 0.0
    %315 = vmatpush1.msra.mxu0 %v254
    %316 = vmatprep.subr.mxu0 0.0
    %317 = vmatpush1.msra.mxu0 %v255
    %318 = vmatprep.subr.mxu0 0.0
    %319 = vmatpush1.msra.mxu0 %v256
    %320 = vmatprep.subr.mxu0 0.0
    %321 = vmatpush1.msra.mxu0 %v257
    %322 = vmatprep.mubr.f32.mxu0 %v224
    %323 = vmatmul.mubr.f32.gmra.mrb[0].mxu0 %v223
    %v324 = vpop.f32.mrb[0].mxu0
    %v325 = vadd.f32 0.0, %v324
    %v326 = vpop.f32.mrb[0].mxu0
    %327 = vdwg.mxu0
    %328 = vmatprep.subr.mxu0 0.0
    %329 = vmatpush1.msra.mxu0 %v135
    %330 = vmatprep.subr.mxu0 0.0
    %331 = vmatpush1.msra.mxu0 %v136
    %332 = vmatprep.subr.mxu0 0.0
    %333 = vmatpush1.msra.mxu0 %v137
    %334 = vmatprep.subr.mxu0 0.0
    %335 = vmatpush1.msra.mxu0 %v138
    %336 = vmatprep.subr.mxu0 0.0
    %337 = vmatpush1.msra.mxu0 %v139
    %338 = vmatprep.subr.mxu0 0.0
    %339 = vmatpush1.msra.mxu0 %v140
    %340 = vmatprep.subr.mxu0 0.0
    %341 = vmatpush1.msra.mxu0 %v141
    %342 = vmatprep.subr.mxu0 0.0
    %343 = vmatpush1.msra.mxu0 %v142
    %344 = vmatprep.subr.mxu0 0.0
    %345 = vmatpush1.msra.mxu0 %v143
    %346 = vmatprep.subr.mxu0 0.0
    %347 = vmatpush1.msra.mxu0 %v144
    %348 = vmatprep.subr.mxu0 0.0
    %349 = vmatpush1.msra.mxu0 %v145
    %350 = vmatprep.subr.mxu0 0.0
    %351 = vmatpush1.msra.mxu0 %v146
    %352 = vmatprep.subr.mxu0 0.0
    %353 = vmatpush1.msra.mxu0 %v147
    %354 = vmatprep.subr.mxu0 0.0
    %355 = vmatpush1.msra.mxu0 %v148
    %356 = vmatprep.subr.mxu0 0.0
    %357 = vmatpush1.msra.mxu0 %v149
    %358 = vmatprep.subr.mxu0 0.0
    %359 = vmatpush1.msra.mxu0 %v150
    %360 = vmatprep.subr.mxu0 0.0
    %361 = vmatpush1.msra.mxu0 %v151
    %362 = vmatprep.subr.mxu0 0.0
    %363 = vmatpush1.msra.mxu0 %v152
    %364 = vmatprep.subr.mxu0 0.0
    %365 = vmatpush1.msra.mxu0 %v153
    %366 = vmatprep.subr.mxu0 0.0
    %367 = vmatpush1.msra.mxu0 %v154
    %368 = vmatprep.subr.mxu0 0.0
    %369 = vmatpush1.msra.mxu0 %v155
    %370 = vmatprep.subr.mxu0 0.0
    %371 = vmatpush1.msra.mxu0 %v156
    %372 = vmatprep.subr.mxu0 0.0
    %373 = vmatpush1.msra.mxu0 %v157
    %374 = vmatprep.subr.mxu0 0.0
    %375 = vmatpush1.msra.mxu0 %v158
    %376 = vmatprep.subr.mxu0 0.0
    %377 = vmatpush1.msra.mxu0 %v159
    %378 = vmatprep.subr.mxu0 0.0
    %379 = vmatpush1.msra.mxu0 %v160
    %380 = vmatprep.subr.mxu0 0.0
    %381 = vmatpush1.msra.mxu0 %v161
    %382 = vmatprep.subr.mxu0 0.0
    %383 = vmatpush1.msra.mxu0 %v162
    %384 = vmatprep.subr.mxu0 0.0
    %385 = vmatpush1.msra.mxu0 %v163
    %386 = vmatprep.subr.mxu0 0.0
    %387 = vmatpush1.msra.mxu0 %v164
    %388 = vmatprep.subr.mxu0 0.0
    %389 = vmatpush1.msra.mxu0 %v165
    %390 = vmatprep.subr.mxu0 0.0
    %391 = vmatpush1.msra.mxu0 %v166
    %392 = vmatprep.mubr.f32.mxu0 %v134
    %393 = vmatmul.mubr.f32.gmra.mrb[0].mxu0 %v133
    %v394 = vpop.f32.mrb[0].mxu0
    %v395 = vadd.f32 %v325, %v394
    %v396 = vpop.f32.mrb[0].mxu0
    %397 = vdwg.mxu0
    %s398 = sld [smem:[#allocation2 + $0x12]]
    %v399 = vstv %s398
    %v400 = vmul.f32 %v399, %v52
    %v401 = vmul.f32 %v399, %v53
    %s402 = sld [smem:[#allocation2 + $0x13]]
    %v403 = vstv %s402
    %v404 = vmul.f32 %v403, %v59
    %v405 = vmul.f32 %v403, %v60
    %v406 = vadd.f32 %v400, %v404
    %v407 = vadd.f32 %v401, %v405
    %s408 = sld [smem:[#allocation2 + $0x14]]
    %v409 = vstv %s408
    %v410 = vmul.f32 %v409, %v68
    %v411 = vmul.f32 %v409, %v69
    %v412 = vadd.f32 %v406, %v410
    %v413 = vadd.f32 %v407, %v411
    %s414 = sld [smem:[#allocation2 + $0x15]]
    %v415 = vstv %s414
    %v416 = vmul.f32 %v415, %v77
    %v417 = vmul.f32 %v415, %v78
    %v418 = vadd.f32 %v412, %v416
    %v419 = vadd.f32 %v413, %v417
    %s420 = sld [smem:[#allocation2 + $0x16]]
    %v421 = vstv %s420
    %v422 = vmul.f32 %v421, %v86
    %v423 = vmul.f32 %v421, %v87
    %v424 = vadd.f32 %v418, %v422
    %v425 = vadd.f32 %v419, %v423
    %s426 = sld [smem:[#allocation2 + $0x17]]
    %v427 = vstv %s426
    %v428 = vmul.f32 %v427, %v95
    %v429 = vmul.f32 %v427, %v96
    %v430 = vadd.f32 %v424, %v428
    %v431 = vadd.f32 %v425, %v429
    %s432 = sld [smem:[#allocation2 + $0x18]]
    %v433 = vstv %s432
    %v434 = vmul.f32 %v433, %v104
    %v435 = vmul.f32 %v433, %v105
    %v436 = vadd.f32 %v430, %v434
    %v437 = vadd.f32 %v431, %v435
    %s438 = sld [smem:[#allocation2 + $0x19]]
    %v439 = vstv %s438
    %v440 = vmul.f32 %v439, %v113
    %v441 = vmul.f32 %v439, %v114
    %v442 = vadd.f32 %v436, %v440
    %v443 = vadd.f32 %v437, %v441
    %s444 = sld [smem:[#allocation2 + $0x1a]]
    %v445 = vstv %s444
    %v446 = vmul.f32 %v445, %v122
    %v447 = vmul.f32 %v445, %v123
    %v448 = vadd.f32 %v442, %v446
    %v449 = vadd.f32 %v443, %v447
    %s450 = sld [smem:[#allocation4 + $0x2]]
    %v451 = vstv %s450
    %v452 = vadd.f32 %v448, %v451
    %v453 = vadd.f32 %v449, %v451
    %v454 = vmax.f32 %v452, 0.0
    %v455 = vmax.f32 %v453, 0.0
    %s456 = scalar_lea.vmem %s3, 512
    %v457 = vld [vmem:[%s456] sm:$0xff]
    %v458 = vld [vmem:[%s456 + $0x8] sm:$0xff]
    %v459 = vld [vmem:[%s456 + $0x10] sm:$0xff]
    %v460 = vld [vmem:[%s456 + $0x18] sm:$0xff]
    %v461 = vld [vmem:[%s456 + $0x20] sm:$0xff]
    %v462 = vld [vmem:[%s456 + $0x28] sm:$0xff]
    %v463 = vld [vmem:[%s456 + $0x30] sm:$0xff]
    %v464 = vld [vmem:[%s456 + $0x38] sm:$0xff]
    %v465 = vld [vmem:[%s456 + $0x40] sm:$0xff]
    %v466 = vld [vmem:[%s456 + $0x48] sm:$0xff]
    %v467 = vld [vmem:[%s456 + $0x50] sm:$0xff]
    %v468 = vld [vmem:[%s456 + $0x58] sm:$0xff]
    %v469 = vld [vmem:[%s456 + $0x60] sm:$0xff]
    %v470 = vld [vmem:[%s456 + $0x68] sm:$0xff]
    %v471 = vld [vmem:[%s456 + $0x70] sm:$0xff]
    %v472 = vld [vmem:[%s456 + $0x78] sm:$0xff]
    %v473 = vld [vmem:[%s456 + $0x80] sm:$0xff]
    %v474 = vld [vmem:[%s456 + $0x88] sm:$0xff]
    %v475 = vld [vmem:[%s456 + $0x90] sm:$0xff]
    %v476 = vld [vmem:[%s456 + $0x98] sm:$0xff]
    %v477 = vld [vmem:[%s456 + $0xa0] sm:$0xff]
    %v478 = vld [vmem:[%s456 + $0xa8] sm:$0xff]
    %v479 = vld [vmem:[%s456 + $0xb0] sm:$0xff]
    %v480 = vld [vmem:[%s456 + $0xb8] sm:$0xff]
    %v481 = vld [vmem:[%s456 + $0xc0] sm:$0xff]
    %v482 = vld [vmem:[%s456 + $0xc8] sm:$0xff]
    %v483 = vld [vmem:[%s456 + $0xd0] sm:$0xff]
    %v484 = vld [vmem:[%s456 + $0xd8] sm:$0xff]
    %v485 = vld [vmem:[%s456 + $0xe0] sm:$0xff]
    %v486 = vld [vmem:[%s456 + $0xe8] sm:$0xff]
    %v487 = vld [vmem:[%s456 + $0xf0] sm:$0xff]
    %v488 = vld [vmem:[%s456 + $0xf8] sm:$0xff]
    %489 = vmatprep.subr.mxu0 0.0
    %490 = vmatpush1.msra.mxu0 %v457
    %491 = vmatprep.subr.mxu0 0.0
    %492 = vmatpush1.msra.mxu0 %v458
    %493 = vmatprep.subr.mxu0 0.0
    %494 = vmatpush1.msra.mxu0 %v459
    %495 = vmatprep.subr.mxu0 0.0
    %496 = vmatpush1.msra.mxu0 %v460
    %497 = vmatprep.subr.mxu0 0.0
    %498 = vmatpush1.msra.mxu0 %v461
    %499 = vmatprep.subr.mxu0 0.0
    %500 = vmatpush1.msra.mxu0 %v462
    %501 = vmatprep.subr.mxu0 0.0
    %502 = vmatpush1.msra.mxu0 %v463
    %503 = vmatprep.subr.mxu0 0.0
    %504 = vmatpush1.msra.mxu0 %v464
    %505 = vmatprep.subr.mxu0 0.0
    %506 = vmatpush1.msra.mxu0 %v465
    %507 = vmatprep.subr.mxu0 0.0
    %508 = vmatpush1.msra.mxu0 %v466
    %509 = vmatprep.subr.mxu0 0.0
    %510 = vmatpush1.msra.mxu0 %v467
    %511 = vmatprep.subr.mxu0 0.0
    %512 = vmatpush1.msra.mxu0 %v468
    %513 = vmatprep.subr.mxu0 0.0
    %514 = vmatpush1.msra.mxu0 %v469
    %515 = vmatprep.subr.mxu0 0.0
    %516 = vmatpush1.msra.mxu0 %v470
    %517 = vmatprep.subr.mxu0 0.0
    %518 = vmatpush1.msra.mxu0 %v471
    %519 = vmatprep.subr.mxu0 0.0
    %520 = vmatpush1.msra.mxu0 %v472
    %521 = vmatprep.subr.mxu0 0.0
    %522 = vmatpush1.msra.mxu0 %v473
    %523 = vmatprep.subr.mxu0 0.0
    %524 = vmatpush1.msra.mxu0 %v474
    %525 = vmatprep.subr.mxu0 0.0
    %526 = vmatpush1.msra.mxu0 %v475
    %527 = vmatprep.subr.mxu0 0.0
    %528 = vmatpush1.msra.mxu0 %v476
    %529 = vmatprep.subr.mxu0 0.0
    %530 = vmatpush1.msra.mxu0 %v477
    %531 = vmatprep.subr.mxu0 0.0
    %532 = vmatpush1.msra.mxu0 %v478
    %533 = vmatprep.subr.mxu0 0.0
    %534 = vmatpush1.msra.mxu0 %v479
    %535 = vmatprep.subr.mxu0 0.0
    %536 = vmatpush1.msra.mxu0 %v480
    %537 = vmatprep.subr.mxu0 0.0
    %538 = vmatpush1.msra.mxu0 %v481
    %539 = vmatprep.subr.mxu0 0.0
    %540 = vmatpush1.msra.mxu0 %v482
    %541 = vmatprep.subr.mxu0 0.0
    %542 = vmatpush1.msra.mxu0 %v483
    %543 = vmatprep.subr.mxu0 0.0
    %544 = vmatpush1.msra.mxu0 %v484
    %545 = vmatprep.subr.mxu0 0.0
    %546 = vmatpush1.msra.mxu0 %v485
    %547 = vmatprep.subr.mxu0 0.0
    %548 = vmatpush1.msra.mxu0 %v486
    %549 = vmatprep.subr.mxu0 0.0
    %550 = vmatpush1.msra.mxu0 %v487
    %551 = vmatprep.subr.mxu0 0.0
    %552 = vmatpush1.msra.mxu0 %v488
    %553 = vmatprep.mubr.f32.mxu0 %v455
    %554 = vmatmul.mubr.f32.gmra.mrb[0].mxu0 %v454
    %v555 = vpop.f32.mrb[0].mxu0
    %v556 = vadd.f32 0.0, %v555
    %v557 = vpop.f32.mrb[0].mxu0
    %558 = vdwg.mxu0
    %v559 = vadd.f32 %v395, %v556
    %s560 = sld [smem:[#allocation2 + $0x1b]]
    %v561 = vstv %s560
    %v562 = vmul.f32 %v561, %v52
    %v563 = vmul.f32 %v561, %v53
    %s564 = sld [smem:[#allocation2 + $0x1c]]
    %v565 = vstv %s564
    %v566 = vmul.f32 %v565, %v59
    %v567 = vmul.f32 %v565, %v60
    %v568 = vadd.f32 %v562, %v566
    %v569 = vadd.f32 %v563, %v567
    %s570 = sld [smem:[#allocation2 + $0x1d]]
    %v571 = vstv %s570
    %v572 = vmul.f32 %v571, %v68
    %v573 = vmul.f32 %v571, %v69
    %v574 = vadd.f32 %v568, %v572
    %v575 = vadd.f32 %v569, %v573
    %s576 = sld [smem:[#allocation2 + $0x1e]]
    %v577 = vstv %s576
    %v578 = vmul.f32 %v577, %v77
    %v579 = vmul.f32 %v577, %v78
    %v580 = vadd.f32 %v574, %v578
    %v581 = vadd.f32 %v575, %v579
    %s582 = sld [smem:[#allocation2 + $0x1f]]
    %v583 = vstv %s582
    %v584 = vmul.f32 %v583, %v86
    %v585 = vmul.f32 %v583, %v87
    %v586 = vadd.f32 %v580, %v584
    %v587 = vadd.f32 %v581, %v585
    %s588 = sld [smem:[#allocation2 + $0x20]]
    %v589 = vstv %s588
    %v590 = vmul.f32 %v589, %v95
    %v591 = vmul.f32 %v589, %v96
    %v592 = vadd.f32 %v586, %v590
    %v593 = vadd.f32 %v587, %v591
    %s594 = sld [smem:[#allocation2 + $0x21]]
    %v595 = vstv %s594
    %v596 = vmul.f32 %v595, %v104
    %v597 = vmul.f32 %v595, %v105
    %v598 = vadd.f32 %v592, %v596
    %v599 = vadd.f32 %v593, %v597
    %s600 = sld [smem:[#allocation2 + $0x22]]
    %v601 = vstv %s600
    %v602 = vmul.f32 %v601, %v113
    %v603 = vmul.f32 %v601, %v114
    %v604 = vadd.f32 %v598, %v602
    %v605 = vadd.f32 %v599, %v603
    %s606 = sld [smem:[#allocation2 + $0x23]]
    %v607 = vstv %s606
    %v608 = vmul.f32 %v607, %v122
    %v609 = vmul.f32 %v607, %v123
    %v610 = vadd.f32 %v604, %v608
    %v611 = vadd.f32 %v605, %v609
    %s612 = sld [smem:[#allocation4 + $0x3]]
    %v613 = vstv %s612
    %v614 = vadd.f32 %v610, %v613
    %v615 = vadd.f32 %v611, %v613
    %v616 = vmax.f32 %v614, 0.0
    %v617 = vmax.f32 %v615, 0.0
    %s618 = scalar_lea.vmem %s3, 768
    %v619 = vld [vmem:[%s618] sm:$0xff]
    %v620 = vld [vmem:[%s618 + $0x8] sm:$0xff]
    %v621 = vld [vmem:[%s618 + $0x10] sm:$0xff]
    %v622 = vld [vmem:[%s618 + $0x18] sm:$0xff]
    %v623 = vld [vmem:[%s618 + $0x20] sm:$0xff]
    %v624 = vld [vmem:[%s618 + $0x28] sm:$0xff]
    %v625 = vld [vmem:[%s618 + $0x30] sm:$0xff]
    %v626 = vld [vmem:[%s618 + $0x38] sm:$0xff]
    %v627 = vld [vmem:[%s618 + $0x40] sm:$0xff]
    %v628 = vld [vmem:[%s618 + $0x48] sm:$0xff]
    %v629 = vld [vmem:[%s618 + $0x50] sm:$0xff]
    %v630 = vld [vmem:[%s618 + $0x58] sm:$0xff]
    %v631 = vld [vmem:[%s618 + $0x60] sm:$0xff]
    %v632 = vld [vmem:[%s618 + $0x68] sm:$0xff]
    %v633 = vld [vmem:[%s618 + $0x70] sm:$0xff]
    %v634 = vld [vmem:[%s618 + $0x78] sm:$0xff]
    %v635 = vld [vmem:[%s618 + $0x80] sm:$0xff]
    %v636 = vld [vmem:[%s618 + $0x88] sm:$0xff]
    %v637 = vld [vmem:[%s618 + $0x90] sm:$0xff]
    %v638 = vld [vmem:[%s618 + $0x98] sm:$0xff]
    %v639 = vld [vmem:[%s618 + $0xa0] sm:$0xff]
    %v640 = vld [vmem:[%s618 + $0xa8] sm:$0xff]
    %v641 = vld [vmem:[%s618 + $0xb0] sm:$0xff]
    %v642 = vld [vmem:[%s618 + $0xb8] sm:$0xff]
    %v643 = vld [vmem:[%s618 + $0xc0] sm:$0xff]
    %v644 = vld [vmem:[%s618 + $0xc8] sm:$0xff]
    %v645 = vld [vmem:[%s618 + $0xd0] sm:$0xff]
    %v646 = vld [vmem:[%s618 + $0xd8] sm:$0xff]
    %v647 = vld [vmem:[%s618 + $0xe0] sm:$0xff]
    %v648 = vld [vmem:[%s618 + $0xe8] sm:$0xff]
    %v649 = vld [vmem:[%s618 + $0xf0] sm:$0xff]
    %v650 = vld [vmem:[%s618 + $0xf8] sm:$0xff]
    %651 = vmatprep.subr.mxu0 0.0
    %652 = vmatpush1.msra.mxu0 %v619
    %653 = vmatprep.subr.mxu0 0.0
    %654 = vmatpush1.msra.mxu0 %v620
    %655 = vmatprep.subr.mxu0 0.0
    %656 = vmatpush1.msra.mxu0 %v621
    %657 = vmatprep.subr.mxu0 0.0
    %658 = vmatpush1.msra.mxu0 %v622
    %659 = vmatprep.subr.mxu0 0.0
    %660 = vmatpush1.msra.mxu0 %v623
    %661 = vmatprep.subr.mxu0 0.0
    %662 = vmatpush1.msra.mxu0 %v624
    %663 = vmatprep.subr.mxu0 0.0
    %664 = vmatpush1.msra.mxu0 %v625
    %665 = vmatprep.subr.mxu0 0.0
    %666 = vmatpush1.msra.mxu0 %v626
    %667 = vmatprep.subr.mxu0 0.0
    %668 = vmatpush1.msra.mxu0 %v627
    %669 = vmatprep.subr.mxu0 0.0
    %670 = vmatpush1.msra.mxu0 %v628
    %671 = vmatprep.subr.mxu0 0.0
    %672 = vmatpush1.msra.mxu0 %v629
    %673 = vmatprep.subr.mxu0 0.0
    %674 = vmatpush1.msra.mxu0 %v630
    %675 = vmatprep.subr.mxu0 0.0
    %676 = vmatpush1.msra.mxu0 %v631
    %677 = vmatprep.subr.mxu0 0.0
    %678 = vmatpush1.msra.mxu0 %v632
    %679 = vmatprep.subr.mxu0 0.0
    %680 = vmatpush1.msra.mxu0 %v633
    %681 = vmatprep.subr.mxu0 0.0
    %682 = vmatpush1.msra.mxu0 %v634
    %683 = vmatprep.subr.mxu0 0.0
    %684 = vmatpush1.msra.mxu0 %v635
    %685 = vmatprep.subr.mxu0 0.0
    %686 = vmatpush1.msra.mxu0 %v636
    %687 = vmatprep.subr.mxu0 0.0
    %688 = vmatpush1.msra.mxu0 %v637
    %689 = vmatprep.subr.mxu0 0.0
    %690 = vmatpush1.msra.mxu0 %v638
    %691 = vmatprep.subr.mxu0 0.0
    %692 = vmatpush1.msra.mxu0 %v639
    %693 = vmatprep.subr.mxu0 0.0
    %694 = vmatpush1.msra.mxu0 %v640
    %695 = vmatprep.subr.mxu0 0.0
    %696 = vmatpush1.msra.mxu0 %v641
    %697 = vmatprep.subr.mxu0 0.0
    %698 = vmatpush1.msra.mxu0 %v642
    %699 = vmatprep.subr.mxu0 0.0
    %700 = vmatpush1.msra.mxu0 %v643
    %701 = vmatprep.subr.mxu0 0.0
    %702 = vmatpush1.msra.mxu0 %v644
    %703 = vmatprep.subr.mxu0 0.0
    %704 = vmatpush1.msra.mxu0 %v645
    %705 = vmatprep.subr.mxu0 0.0
    %706 = vmatpush1.msra.mxu0 %v646
    %707 = vmatprep.subr.mxu0 0.0
    %708 = vmatpush1.msra.mxu0 %v647
    %709 = vmatprep.subr.mxu0 0.0
    %710 = vmatpush1.msra.mxu0 %v648
    %711 = vmatprep.subr.mxu0 0.0
    %712 = vmatpush1.msra.mxu0 %v649
    %713 = vmatprep.subr.mxu0 0.0
    %714 = vmatpush1.msra.mxu0 %v650
    %715 = vmatprep.mubr.f32.mxu0 %v617
    %716 = vmatmul.mubr.f32.gmra.mrb[0].mxu0 %v616
    %v717 = vpop.f32.mrb[0].mxu0
    %v718 = vadd.f32 0.0, %v717
    %v719 = vpop.f32.mrb[0].mxu0
    %720 = vdwg.mxu0
    %v721 = vadd.f32 %v559, %v718
    %v722 = vld [vmem:[%s4] sm:$0x1]
    %v724 = vlaneseq
    %v725 = vshrl.u32 %v724, 7
    %v726 = vsub.s32 0, %v725
    %v727 = vrot.slane %v722, %v726
    %v729 = vadd.f32 %v721, %v727
    %v730 = vmax.f32 %v729, 0.0
    %v731 = vld [vmem:[%s5] sm:$0xff]
    %v732 = vld [vmem:[%s5 + $0x8] sm:$0xff]
    %v733 = vld [vmem:[%s5 + $0x10] sm:$0xff]
    %v734 = vld [vmem:[%s5 + $0x18] sm:$0xff]
    %v735 = vld [vmem:[%s5 + $0x20] sm:$0xff]
    %v736 = vld [vmem:[%s5 + $0x28] sm:$0xff]
    %v737 = vld [vmem:[%s5 + $0x30] sm:$0xff]
    %v738 = vld [vmem:[%s5 + $0x38] sm:$0xff]
    %v739 = vld [vmem:[%s5 + $0x40] sm:$0xff]
    %v740 = vld [vmem:[%s5 + $0x48] sm:$0xff]
    %v741 = vld [vmem:[%s5 + $0x50] sm:$0xff]
    %v742 = vld [vmem:[%s5 + $0x58] sm:$0xff]
    %v743 = vld [vmem:[%s5 + $0x60] sm:$0xff]
    %v744 = vld [vmem:[%s5 + $0x68] sm:$0xff]
    %v745 = vld [vmem:[%s5 + $0x70] sm:$0xff]
    %v746 = vld [vmem:[%s5 + $0x78] sm:$0xff]
    %v747 = vld [vmem:[%s6] sm:$0x1]
    %v749 = vlaneseq
    %v750 = vshrl.u32 %v749, 7
    %v751 = vsub.s32 0, %v750
    %v752 = vrot.slane %v747, %v751
    %754 = vmatprep.subr.mxu0 0.0
    %755 = vmatpush1.msra.mxu0 %v731
    %756 = vmatprep.subr.mxu0 0.0
    %757 = vmatpush1.msra.mxu0 %v732
    %758 = vmatprep.subr.mxu0 0.0
    %759 = vmatpush1.msra.mxu0 %v733
    %760 = vmatprep.subr.mxu0 0.0
    %761 = vmatpush1.msra.mxu0 %v734
    %762 = vmatprep.subr.mxu0 0.0
    %763 = vmatpush1.msra.mxu0 %v735
    %764 = vmatprep.subr.mxu0 0.0
    %765 = vmatpush1.msra.mxu0 %v736
    %766 = vmatprep.subr.mxu0 0.0
    %767 = vmatpush1.msra.mxu0 %v737
    %768 = vmatprep.subr.mxu0 0.0
    %769 = vmatpush1.msra.mxu0 %v738
    %770 = vmatprep.subr.mxu0 0.0
    %771 = vmatpush1.msra.mxu0 %v739
    %772 = vmatprep.subr.mxu0 0.0
    %773 = vmatpush1.msra.mxu0 %v740
    %774 = vmatprep.subr.mxu0 0.0
    %775 = vmatpush1.msra.mxu0 %v741
    %776 = vmatprep.subr.mxu0 0.0
    %777 = vmatpush1.msra.mxu0 %v742
    %778 = vmatprep.subr.mxu0 0.0
    %779 = vmatpush1.msra.mxu0 %v743
    %780 = vmatprep.subr.mxu0 0.0
    %781 = vmatpush1.msra.mxu0 %v744
    %782 = vmatprep.subr.mxu0 0.0
    %783 = vmatpush1.msra.mxu0 %v745
    %784 = vmatprep.subr.mxu0 0.0
    %785 = vmatpush1.msra.mxu0 %v746
    %786 = vmatprep.subr.mxu0 0.0
    %787 = vmatpush1.msra.mxu0 0.0
    %788 = vmatprep.subr.mxu0 0.0
    %789 = vmatpush1.msra.mxu0 0.0
    %790 = vmatprep.subr.mxu0 0.0
    %791 = vmatpush1.msra.mxu0 0.0
    %792 = vmatprep.subr.mxu0 0.0
    %793 = vmatpush1.msra.mxu0 0.0
    %794 = vmatprep.subr.mxu0 0.0
    %795 = vmatpush1.msra.mxu0 0.0
    %796 = vmatprep.subr.mxu0 0.0
    %797 = vmatpush1.msra.mxu0 0.0
    %798 = vmatprep.subr.mxu0 0.0
    %799 = vmatpush1.msra.mxu0 0.0
    %800 = vmatprep.subr.mxu0 0.0
    %801 = vmatpush1.msra.mxu0 0.0
    %802 = vmatprep.subr.mxu0 0.0
    %803 = vmatpush1.msra.mxu0 0.0
    %804 = vmatprep.subr.mxu0 0.0
    %805 = vmatpush1.msra.mxu0 0.0
    %806 = vmatprep.subr.mxu0 0.0
    %807 = vmatpush1.msra.mxu0 0.0
    %808 = vmatprep.subr.mxu0 0.0
    %809 = vmatpush1.msra.mxu0 0.0
    %810 = vmatprep.subr.mxu0 0.0
    %811 = vmatpush1.msra.mxu0 0.0
    %812 = vmatprep.subr.mxu0 0.0
    %813 = vmatpush1.msra.mxu0 0.0
    %814 = vmatprep.subr.mxu0 0.0
    %815 = vmatpush1.msra.mxu0 0.0
    %816 = vmatprep.subr.mxu0 0.0
    %817 = vmatpush1.msra.mxu0 0.0
    %818 = vmatprep.mubr.f32.mxu0 0.0
    %819 = vmatmul.mubr.f32.gmra.mrb[0].mxu0 %v730
    %v820 = vpop.f32.mrb[0].mxu0
    %v821 = vadd.f32 %v752, %v820
    %v822 = vpop.f32.mrb[0].mxu0
    %823 = vdwg.mxu0
    %v824 = vlaneseq
    %v825 = vand.u32 %v824, 127
    %vm826 = vcmp.lt.s32.totalorder %v825, 2
    %v827 = vsel %vm826, %v821, -inf
    %828 = vmax.xlane.f32.xlu0 %v827
    %v829 = vpop.xlane.xlu0 %828
    %v830 = vsub.f32 %v827, %v829
    %v831 = vmul.f32 %v830, 1.442695
    %v832 = vpow.pop %v831
    %833 = vadd.xlane.f32.xlu0 %v832
    %v834 = vpop.xlane.xlu0 %833
    %v835 = vlog2.pop %v834
    %v836 = vmul.f32 %v835, 0.6931472
    %v837 = vadd.f32 %v836, %v829
    %v838 = vsub.f32 %v821, %v837
    %839 = vst [vmem:[%s7] sm:$0xff] %v838
    // Predicated region
    $region38: #{chennet_forward.1} parent=1 // pred_check
      _
    $region39: #{chennet_forward.1} parent=1 // pred_check_branch
      %841 = sbr.rel (0) target = $region41
    $region40: #{chennet_forward.1} parent=1 // pred_region
      _
    $region41: #{chennet_forward.1} parent=1 // pred_fallthru
      _
    // Predicated region
    $region42: #{chennet_forward.1} parent=1 // pred_check
      _
    $region43: #{chennet_forward.1} parent=1 // pred_check_branch
      %843 = sbr.rel (0) target = $region45
    $region44: #{chennet_forward.1} parent=1 // pred_region
      _
    $region45: #{chennet_forward.1} parent=1 // pred_fallthru
      _
    %844 = vsyncpa [#allocation3], 1
    %845 = vsyncpa [#allocation5], 1

</llo_original>
